<compile_context>
chip_gen: v7x
topology: tpu7x:2x2x1
jax: 0.10.0
libtpu: 0.0.40
codegen_flags: <defaults>
</compile_context>

<pallas_src>
import numpy as np

import jax
import jax.numpy as jnp
from jax.experimental import pallas as pl
from jax.experimental.pallas import tpu as pltpu


# ----------------------------------------------------------------------------
# Fused Pallas kernel
# ----------------------------------------------------------------------------

def _seq2seq_kernel(enc_x_ref, dec_x_ref,
                    w_enc_ref, b_enc_ref,
                    w_dec_ref, b_dec_ref,
                    h0_ref, c0_ref,
                    fc_w_ref, fc_b_ref,
                    out_ref,
                    h_sc, c_sc):
    """Fused Seq2Seq forward pass.

    enc_x_ref : (S_in,  B, E)    f32   embedded encoder inputs
    dec_x_ref : (S_tgt, B, E)    f32   embedded decoder inputs (teacher forcing)
    w_enc_ref : (L, E+H, 4H)     bf16  per-layer [W_ih ; W_hh] pre-stacked & transposed
    b_enc_ref : (L, 1, 4H)       f32   per-layer (b_ih + b_hh)
    w_dec_ref : (L, E+H, 4H)     bf16
    b_dec_ref : (L, 1, 4H)       f32
    h0_ref    : (L, 1, H)        f32   learned initial hidden state (broadcast over B)
    c0_ref    : (L, 1, H)        f32
    fc_w_ref  : (H, Vpad)        bf16  output projection, lane-padded to mult. of 128
    fc_b_ref  : (1, Vpad)        f32
    out_ref   : (S_tgt, B, Vpad) f32   decoder logits (lane-dense padded)
    h_sc,c_sc : (L, B, H)        f32   VMEM-resident recurrent state

    Gate order follows PyTorch nn.LSTM: [i, f, g, o] along the 4H axis.
    """
    L, B, H = h_sc.shape

    # ---- initial hidden / cell state: broadcast learned (1, H) rows over batch
    for l in range(L):
        h_sc[l] = jnp.broadcast_to(h0_ref[l], (B, H))
        c_sc[l] = jnp.broadcast_to(c0_ref[l], (B, H))

    def lstm_cell(x, l, w_ref, b_ref):
        """One LSTM cell update for layer `l`. x: (B, E) f32 -> new h (B, H) f32."""
        h_prev = h_sc[l]                                    # (B, H) f32
        c_prev = c_sc[l]
        # Single fused MXU matmul: [x_t, h_{t-1}] @ [W_ih ; W_hh]  (bf16 in, f32 acc)
        inp = jnp.concatenate([x, h_prev], axis=-1).astype(jnp.bfloat16)
        gates = (jnp.dot(inp, w_ref[l], preferred_element_type=jnp.float32)
                 + b_ref[l])                                # (B, 4H) f32
        i_g = jax.nn.sigmoid(gates[:, 0 * H:1 * H])
        f_g = jax.nn.sigmoid(gates[:, 1 * H:2 * H])
        g_g = jnp.tanh(gates[:, 2 * H:3 * H])
        o_g = jax.nn.sigmoid(gates[:, 3 * H:4 * H])
        c_new = f_g * c_prev + i_g * g_g
        h_new = o_g * jnp.tanh(c_new)
        h_sc[l] = h_new
        c_sc[l] = c_new
        return h_new

    # ---- Encoder: only the final per-layer (h, c) is needed downstream -------
    @pl.loop(0, enc_x_ref.shape[0])
    def _enc_step(t):
        x = enc_x_ref[t]                                    # (B, E) f32
        for l in range(L):
            x = lstm_cell(x, l, w_enc_ref, b_enc_ref)

    # ---- Decoder (teacher forcing) with the FC projection fused in -----------
    # The recurrent state scratch simply carries over, which implements
    # decoder.hidden = encoder.hidden ; decoder.cell = encoder.cell.
    @pl.loop(0, dec_x_ref.shape[0])
    def _dec_step(t):
        x = dec_x_ref[t]                                    # (B, E) f32
        for l in range(L):
            x = lstm_cell(x, l, w_dec_ref, b_dec_ref)
        logits = (jnp.dot(x.astype(jnp.bfloat16), fc_w_ref[...],
                          preferred_element_type=jnp.float32)
                  + fc_b_ref[...])                          # (B, Vpad) f32
        out_ref[t] = logits                                 # lane-dense store


# ----------------------------------------------------------------------------
# Parameter construction (deterministic, mirrors the PyTorch module's shapes)
# ----------------------------------------------------------------------------

def make_params(key, vocab, emb, hidden, num_layers):
    # The fused kernel stacks [W_ih ; W_hh] per layer into one (E+H, 4H) block;
    # uniform stacking across layers requires emb == hidden (true for the
    # module's defaults: embedding_size == hidden_size == 256).
    assert emb == hidden, "fused weight stacking requires embedding_size == hidden_size"

    keys = iter(jax.random.split(key, 64))
    bound = 1.0 / np.sqrt(hidden)

    def uni(shape, b=bound):
        return jax.random.uniform(next(keys), shape, jnp.float32, -b, b)

    def lstm_stack(input_size):
        ws, bs = [], []
        for layer in range(num_layers):
            in_sz = input_size if layer == 0 else hidden
            wih = uni((4 * hidden, in_sz))          # PyTorch weight_ih_l{k}
            whh = uni((4 * hidden, hidden))         # PyTorch weight_hh_l{k}
            b_ih = uni((4 * hidden,))
            b_hh = uni((4 * hidden,))
            ws.append(jnp.concatenate([wih.T, whh.T], axis=0))   # (in_sz+H, 4H)
            bs.append((b_ih + b_hh)[None, :])                    # (1, 4H)
        return (jnp.stack(ws, 0).astype(jnp.bfloat16),           # (L, E+H, 4H) bf16
                jnp.stack(bs, 0))                                # (L, 1, 4H)   f32

    # Encoder
    enc_embedding = jax.random.normal(next(keys), (vocab, emb), jnp.float32)
    w_enc, b_enc = lstm_stack(emb)
    xav = np.sqrt(6.0 / (1 + hidden))               # xavier_uniform on (L,1,H)
    hidden0 = jax.random.uniform(next(keys), (num_layers, 1, hidden),
                                 jnp.float32, -xav, xav)
    cell0 = jax.random.uniform(next(keys), (num_layers, 1, hidden),
                               jnp.float32, -xav, xav)
    # Decoder
    dec_embedding = jax.random.normal(next(keys), (vocab, emb), jnp.float32)
    w_dec, b_dec = lstm_stack(emb)
    fc_w = uni((vocab, hidden))
    fc_b = uni((vocab,))

    # Pad the FC output dimension up to a multiple of 128 lanes so the kernel's
    # only HBM output is a full-lane (unmasked) store; sliced back afterwards.
    vpad = int(np.ceil(vocab / 128.0)) * 128
    fc_w_pad = jnp.zeros((hidden, vpad), jnp.float32).at[:, :vocab].set(fc_w.T)
    fc_b_pad = jnp.zeros((1, vpad), jnp.float32).at[:, :vocab].set(fc_b[None, :])

    return dict(enc_embedding=enc_embedding, w_enc=w_enc, b_enc=b_enc,
                hidden0=hidden0, cell0=cell0,
                dec_embedding=dec_embedding, w_dec=w_dec, b_dec=b_dec,
                fc_w=fc_w_pad.astype(jnp.bfloat16), fc_b=fc_b_pad)


# ----------------------------------------------------------------------------
# Seq2Seq forward
# ----------------------------------------------------------------------------

@jax.jit
def seq2seq_forward(params, inputs, targets):
    """inputs: (S_in, B) int32, targets: (S_tgt, B) int32 (seq-first, like nn.LSTM).

    Returns (decoder_out (S_tgt, B, vocab) f32, predicted_words (S_tgt, B) i32)
    BEFORE the reference's data-dependent truncation (applied host-side below).
    Teacher forcing branch (teacher_forcing_prob = 1).
    """
    L = params["w_enc"].shape[0]
    H = params["hidden0"].shape[-1]
    B = inputs.shape[1]
    T = targets.shape[0]
    V = params["enc_embedding"].shape[0]
    Vpad = params["fc_w"].shape[-1]

    # Embedding lookups (gathers) in plain JAX.
    enc_x = jnp.take(params["enc_embedding"], inputs, axis=0)       # (S_in, B, E)
    decoder_in = jnp.zeros_like(targets).at[1:].set(targets[:-1])   # teacher forcing
    dec_x = jnp.take(params["dec_embedding"], decoder_in, axis=0)   # (S_tgt, B, E)

    logits_pad = pl.pallas_call(
        _seq2seq_kernel,
        out_shape=jax.ShapeDtypeStruct((T, B, Vpad), jnp.float32),
        scratch_shapes=[pltpu.VMEM((L, B, H), jnp.float32),   # hidden state
                        pltpu.VMEM((L, B, H), jnp.float32)],  # cell state
    )(enc_x, dec_x,
      params["w_enc"], params["b_enc"],
      params["w_dec"], params["b_dec"],
      params["hidden0"], params["cell0"],
      params["fc_w"], params["fc_b"])

    decoder_out = logits_pad[:, :, :V]
    predicted_words = jnp.argmax(decoder_out, axis=-1).astype(jnp.int32)
    return decoder_out, predicted_words


def truncate_like_reference(decoder_out, predicted_words):
    """Host-side replica of the reference early-break:
    break at the first step i where `not ((pw[i]-1).byte().all())`, i.e. any
    element of predicted_words[i] is congruent to 1 mod 256; keep [:i+1]."""
    pw = np.asarray(predicted_words)
    out = np.asarray(decoder_out)
    for i in range(pw.shape[0]):
        if not np.all(((pw[i] - 1) & 0xFF) != 0):
            return out[:i + 1], pw[:i + 1]
    return out, pw


# ----------------------------------------------------------------------------

if __name__ == "__main__":
    # Small, TPU-friendly shapes consistent with the module's forward:
    VOCAB, EMB, HID, LAYERS = 16, 32, 32, 3
    S_IN, S_TGT, BATCH = 8, 8, 8

    key = jax.random.PRNGKey(0)
    k_par, k_in, k_tgt = jax.random.split(key, 3)

    params = make_params(k_par, VOCAB, EMB, HID, LAYERS)
    inputs = jax.random.randint(k_in, (S_IN, BATCH), 0, VOCAB, jnp.int32)
    targets = jax.random.randint(k_tgt, (S_TGT, BATCH), 0, VOCAB, jnp.int32)

    decoder_out, predicted_words = seq2seq_forward(params, inputs, targets)
    decoder_out = jax.block_until_ready(decoder_out)
    predicted_words = jax.block_until_ready(predicted_words)

    # Data-dependent truncation (mirrors the reference loop's break), host-side.
    # TODO(synk): the early-break is inherently data-dependent/host-visible; it has
    # no clean in-kernel Pallas equivalent without dynamic output shapes.
    out_trunc, pw_trunc = truncate_like_reference(decoder_out, predicted_words)

    assert decoder_out.shape == (S_TGT, BATCH, VOCAB)
    assert predicted_words.shape == (S_TGT, BATCH)
    assert out_trunc.shape[0] == pw_trunc.shape[0] >= 1
    assert np.all(np.isfinite(np.asarray(decoder_out)))

    print("KERNEL_OK")
</pallas_src>

<mosaic_0001>
module attributes {stable_mosaic.version = 11 : i64} {
  func.func @_seq2seq_kernel(%arg0: memref<8x8x32xf32, #tpu.memory_space<vmem>>, %arg1: memref<8x8x32xf32, #tpu.memory_space<vmem>>, %arg2: memref<3x64x128xbf16, #tpu.memory_space<vmem>>, %arg3: memref<3x1x128xf32, #tpu.memory_space<vmem>>, %arg4: memref<3x64x128xbf16, #tpu.memory_space<vmem>>, %arg5: memref<3x1x128xf32, #tpu.memory_space<vmem>>, %arg6: memref<3x1x32xf32, #tpu.memory_space<vmem>>, %arg7: memref<3x1x32xf32, #tpu.memory_space<vmem>>, %arg8: memref<32x128xbf16, #tpu.memory_space<vmem>>, %arg9: memref<1x128xf32, #tpu.memory_space<vmem>>, %arg10: memref<8x8x128xf32, #tpu.memory_space<vmem>>, %arg11: memref<3x8x32xf32, #tpu.memory_space<vmem>>, %arg12: memref<3x8x32xf32, #tpu.memory_space<vmem>>) attributes {dimension_semantics = [], scalar_prefetch = 0 : i64, scratch_operands = 2 : i64, tpu.core_type = #tpu.core_type<tc>} {
    %c0 = arith.constant 0 : index
    %c0_0 = arith.constant 0 : index
    %c0_1 = arith.constant 0 : index
    %0 = vector.load %arg6[%c0, %c0_0, %c0_1] : memref<3x1x32xf32, #tpu.memory_space<vmem>>, vector<1x1x32xf32>
    %1 = vector.shape_cast %0 : vector<1x1x32xf32> to vector<1x32xf32>
    %2 = vector.shape_cast %1 : vector<1x32xf32> to vector<1x32xf32>
    %3 = vector.broadcast %2 : vector<1x32xf32> to vector<8x32xf32>
    %c0_2 = arith.constant 0 : index
    %c0_3 = arith.constant 0 : index
    %c0_4 = arith.constant 0 : index
    %4 = vector.load %arg11[%c0_2, %c0_3, %c0_4] : memref<3x8x32xf32, #tpu.memory_space<vmem>>, vector<1x8x32xf32>
    %5 = vector.shape_cast %4 : vector<1x8x32xf32> to vector<8x32xf32>
    %6 = vector.shape_cast %3 : vector<8x32xf32> to vector<1x8x32xf32>
    tpu.vector_store %arg11[%c0_2, %c0_3, %c0_4], %6 {strides = array<i32>} : memref<3x8x32xf32, #tpu.memory_space<vmem>>, vector<1x8x32xf32>,
    %c0_5 = arith.constant 0 : index
    %c0_6 = arith.constant 0 : index
    %c0_7 = arith.constant 0 : index
    %7 = vector.load %arg7[%c0_5, %c0_6, %c0_7] : memref<3x1x32xf32, #tpu.memory_space<vmem>>, vector<1x1x32xf32>
    %8 = vector.shape_cast %7 : vector<1x1x32xf32> to vector<1x32xf32>
    %9 = vector.shape_cast %8 : vector<1x32xf32> to vector<1x32xf32>
    %10 = vector.broadcast %9 : vector<1x32xf32> to vector<8x32xf32>
    %c0_8 = arith.constant 0 : index
    %c0_9 = arith.constant 0 : index
    %c0_10 = arith.constant 0 : index
    %11 = vector.load %arg12[%c0_8, %c0_9, %c0_10] : memref<3x8x32xf32, #tpu.memory_space<vmem>>, vector<1x8x32xf32>
    %12 = vector.shape_cast %11 : vector<1x8x32xf32> to vector<8x32xf32>
    %13 = vector.shape_cast %10 : vector<8x32xf32> to vector<1x8x32xf32>
    tpu.vector_store %arg12[%c0_8, %c0_9, %c0_10], %13 {strides = array<i32>} : memref<3x8x32xf32, #tpu.memory_space<vmem>>, vector<1x8x32xf32>,
    %c1 = arith.constant 1 : index
    %c0_11 = arith.constant 0 : index
    %c0_12 = arith.constant 0 : index
    %14 = vector.load %arg6[%c1, %c0_11, %c0_12] : memref<3x1x32xf32, #tpu.memory_space<vmem>>, vector<1x1x32xf32>
    %15 = vector.shape_cast %14 : vector<1x1x32xf32> to vector<1x32xf32>
    %16 = vector.shape_cast %15 : vector<1x32xf32> to vector<1x32xf32>
    %17 = vector.broadcast %16 : vector<1x32xf32> to vector<8x32xf32>
    %c1_13 = arith.constant 1 : index
    %c0_14 = arith.constant 0 : index
    %c0_15 = arith.constant 0 : index
    %18 = vector.load %arg11[%c1_13, %c0_14, %c0_15] : memref<3x8x32xf32, #tpu.memory_space<vmem>>, vector<1x8x32xf32>
    %19 = vector.shape_cast %18 : vector<1x8x32xf32> to vector<8x32xf32>
    %20 = vector.shape_cast %17 : vector<8x32xf32> to vector<1x8x32xf32>
    tpu.vector_store %arg11[%c1_13, %c0_14, %c0_15], %20 {strides = array<i32>} : memref<3x8x32xf32, #tpu.memory_space<vmem>>, vector<1x8x32xf32>,
    %c1_16 = arith.constant 1 : index
    %c0_17 = arith.constant 0 : index
    %c0_18 = arith.constant 0 : index
    %21 = vector.load %arg7[%c1_16, %c0_17, %c0_18] : memref<3x1x32xf32, #tpu.memory_space<vmem>>, vector<1x1x32xf32>
    %22 = vector.shape_cast %21 : vector<1x1x32xf32> to vector<1x32xf32>
    %23 = vector.shape_cast %22 : vector<1x32xf32> to vector<1x32xf32>
    %24 = vector.broadcast %23 : vector<1x32xf32> to vector<8x32xf32>
    %c1_19 = arith.constant 1 : index
    %c0_20 = arith.constant 0 : index
    %c0_21 = arith.constant 0 : index
    %25 = vector.load %arg12[%c1_19, %c0_20, %c0_21] : memref<3x8x32xf32, #tpu.memory_space<vmem>>, vector<1x8x32xf32>
    %26 = vector.shape_cast %25 : vector<1x8x32xf32> to vector<8x32xf32>
    %27 = vector.shape_cast %24 : vector<8x32xf32> to vector<1x8x32xf32>
    tpu.vector_store %arg12[%c1_19, %c0_20, %c0_21], %27 {strides = array<i32>} : memref<3x8x32xf32, #tpu.memory_space<vmem>>, vector<1x8x32xf32>,
    %c2 = arith.constant 2 : index
    %c0_22 = arith.constant 0 : index
    %c0_23 = arith.constant 0 : index
    %28 = vector.load %arg6[%c2, %c0_22, %c0_23] : memref<3x1x32xf32, #tpu.memory_space<vmem>>, vector<1x1x32xf32>
    %29 = vector.shape_cast %28 : vector<1x1x32xf32> to vector<1x32xf32>
    %30 = vector.shape_cast %29 : vector<1x32xf32> to vector<1x32xf32>
    %31 = vector.broadcast %30 : vector<1x32xf32> to vector<8x32xf32>
    %c2_24 = arith.constant 2 : index
    %c0_25 = arith.constant 0 : index
    %c0_26 = arith.constant 0 : index
    %32 = vector.load %arg11[%c2_24, %c0_25, %c0_26] : memref<3x8x32xf32, #tpu.memory_space<vmem>>, vector<1x8x32xf32>
    %33 = vector.shape_cast %32 : vector<1x8x32xf32> to vector<8x32xf32>
    %34 = vector.shape_cast %31 : vector<8x32xf32> to vector<1x8x32xf32>
    tpu.vector_store %arg11[%c2_24, %c0_25, %c0_26], %34 {strides = array<i32>} : memref<3x8x32xf32, #tpu.memory_space<vmem>>, vector<1x8x32xf32>,
    %c2_27 = arith.constant 2 : index
    %c0_28 = arith.constant 0 : index
    %c0_29 = arith.constant 0 : index
    %35 = vector.load %arg7[%c2_27, %c0_28, %c0_29] : memref<3x1x32xf32, #tpu.memory_space<vmem>>, vector<1x1x32xf32>
    %36 = vector.shape_cast %35 : vector<1x1x32xf32> to vector<1x32xf32>
    %37 = vector.shape_cast %36 : vector<1x32xf32> to vector<1x32xf32>
    %38 = vector.broadcast %37 : vector<1x32xf32> to vector<8x32xf32>
    %c2_30 = arith.constant 2 : index
    %c0_31 = arith.constant 0 : index
    %c0_32 = arith.constant 0 : index
    %39 = vector.load %arg12[%c2_30, %c0_31, %c0_32] : memref<3x8x32xf32, #tpu.memory_space<vmem>>, vector<1x8x32xf32>
    %40 = vector.shape_cast %39 : vector<1x8x32xf32> to vector<8x32xf32>
    %41 = vector.shape_cast %38 : vector<8x32xf32> to vector<1x8x32xf32>
    tpu.vector_store %arg12[%c2_30, %c0_31, %c0_32], %41 {strides = array<i32>} : memref<3x8x32xf32, #tpu.memory_space<vmem>>, vector<1x8x32xf32>,
    %c0_i32 = arith.constant 0 : i32
    %c8_i32 = arith.constant 8 : i32
    %42 = arith.addi %c0_i32, %c8_i32 : i32
    %c1_i32 = arith.constant 1 : i32
    scf.for %arg13 = %c0_i32 to %42 step %c1_i32  : i32 {
      %c1_i32_38 = arith.constant 1 : i32
      %44 = arith.muli %arg13, %c1_i32_38 : i32
      %c0_i32_39 = arith.constant 0 : i32
      %45 = arith.addi %c0_i32_39, %44 : i32
      %46 = arith.index_cast %45 : i32 to index
      %c0_40 = arith.constant 0 : index
      %c0_41 = arith.constant 0 : index
      %47 = vector.load %arg0[%46, %c0_40, %c0_41] : memref<8x8x32xf32, #tpu.memory_space<vmem>>, vector<1x8x32xf32>
      %48 = vector.shape_cast %47 : vector<1x8x32xf32> to vector<8x32xf32>
      %c0_42 = arith.constant 0 : index
      %c0_43 = arith.constant 0 : index
      %c0_44 = arith.constant 0 : index
      %49 = vector.load %arg11[%c0_42, %c0_43, %c0_44] : memref<3x8x32xf32, #tpu.memory_space<vmem>>, vector<1x8x32xf32>
      %50 = vector.shape_cast %49 : vector<1x8x32xf32> to vector<8x32xf32>
      %c0_45 = arith.constant 0 : index
      %c0_46 = arith.constant 0 : index
      %c0_47 = arith.constant 0 : index
      %51 = vector.load %arg12[%c0_45, %c0_46, %c0_47] : memref<3x8x32xf32, #tpu.memory_space<vmem>>, vector<1x8x32xf32>
      %52 = vector.shape_cast %51 : vector<1x8x32xf32> to vector<8x32xf32>
      %53 = tpu.concatenate %48, %50 in 1 : vector<8x32xf32>, vector<8x32xf32> -> vector<8x64xf32>
      %54 = arith.truncf %53 : vector<8x64xf32> to vector<8x64xbf16>
      %c0_48 = arith.constant 0 : index
      %c0_49 = arith.constant 0 : index
      %c0_50 = arith.constant 0 : index
      %55 = vector.load %arg2[%c0_48, %c0_49, %c0_50] : memref<3x64x128xbf16, #tpu.memory_space<vmem>>, vector<1x64x128xbf16>
      %56 = vector.shape_cast %55 : vector<1x64x128xbf16> to vector<64x128xbf16>
      %cst = arith.constant dense<0.000000e+00> : vector<8x128xf32>
      %57 = tpu.matmul %54, %56, %cst {dimension_numbers = #tpu.dot_dimension_numbers<[1], [0], [0], [1], [0, 0, 1, 1], [], []>} : vector<8x64xbf16>, vector<64x128xbf16>, vector<8x128xf32> -> vector<8x128xf32>
      %c0_51 = arith.constant 0 : index
      %c0_52 = arith.constant 0 : index
      %c0_53 = arith.constant 0 : index
      %58 = vector.load %arg3[%c0_51, %c0_52, %c0_53] : memref<3x1x128xf32, #tpu.memory_space<vmem>>, vector<1x1x128xf32>
      %59 = vector.shape_cast %58 : vector<1x1x128xf32> to vector<1x128xf32>
      %60 = vector.broadcast %59 : vector<1x128xf32> to vector<8x128xf32>
      %61 = arith.addf %57, %60 : vector<8x128xf32>
      %62 = vector.extract_strided_slice %61 {offsets = [0, 0], sizes = [8, 32], strides = [1, 1]} : vector<8x128xf32> to vector<8x32xf32>
      %63 = arith.negf %62 : vector<8x32xf32>
      %64 = math.exp %63 : vector<8x32xf32>
      %cst_54 = arith.constant 1.000000e+00 : f32
      %65 = vector.broadcast %cst_54 : f32 to vector<8x32xf32>
      %66 = arith.addf %65, %64 : vector<8x32xf32>
      %67 = arith.divf %65, %66 : vector<8x32xf32>
      %68 = vector.extract_strided_slice %61 {offsets = [0, 32], sizes = [8, 32], strides = [1, 1]} : vector<8x128xf32> to vector<8x32xf32>
      %69 = arith.negf %68 : vector<8x32xf32>
      %70 = math.exp %69 : vector<8x32xf32>
      %cst_55 = arith.constant 1.000000e+00 : f32
      %71 = vector.broadcast %cst_55 : f32 to vector<8x32xf32>
      %72 = arith.addf %71, %70 : vector<8x32xf32>
      %73 = arith.divf %71, %72 : vector<8x32xf32>
      %74 = vector.extract_strided_slice %61 {offsets = [0, 64], sizes = [8, 32], strides = [1, 1]} : vector<8x128xf32> to vector<8x32xf32>
      %75 = math.tanh %74 : vector<8x32xf32>
      %76 = vector.extract_strided_slice %61 {offsets = [0, 96], sizes = [8, 32], strides = [1, 1]} : vector<8x128xf32> to vector<8x32xf32>
      %77 = arith.negf %76 : vector<8x32xf32>
      %78 = math.exp %77 : vector<8x32xf32>
      %cst_56 = arith.constant 1.000000e+00 : f32
      %79 = vector.broadcast %cst_56 : f32 to vector<8x32xf32>
      %80 = arith.addf %79, %78 : vector<8x32xf32>
      %81 = arith.divf %79, %80 : vector<8x32xf32>
      %82 = arith.mulf %73, %52 : vector<8x32xf32>
      %83 = arith.mulf %67, %75 : vector<8x32xf32>
      %84 = arith.addf %82, %83 : vector<8x32xf32>
      %85 = math.tanh %84 : vector<8x32xf32>
      %86 = arith.mulf %81, %85 : vector<8x32xf32>
      %c0_57 = arith.constant 0 : index
      %c0_58 = arith.constant 0 : index
      %c0_59 = arith.constant 0 : index
      %87 = vector.load %arg11[%c0_57, %c0_58, %c0_59] : memref<3x8x32xf32, #tpu.memory_space<vmem>>, vector<1x8x32xf32>
      %88 = vector.shape_cast %87 : vector<1x8x32xf32> to vector<8x32xf32>
      %89 = vector.shape_cast %86 : vector<8x32xf32> to vector<1x8x32xf32>
      tpu.vector_store %arg11[%c0_57, %c0_58, %c0_59], %89 {strides = array<i32>} : memref<3x8x32xf32, #tpu.memory_space<vmem>>, vector<1x8x32xf32>,
      %c0_60 = arith.constant 0 : index
      %c0_61 = arith.constant 0 : index
      %c0_62 = arith.constant 0 : index
      %90 = vector.load %arg12[%c0_60, %c0_61, %c0_62] : memref<3x8x32xf32, #tpu.memory_space<vmem>>, vector<1x8x32xf32>
      %91 = vector.shape_cast %90 : vector<1x8x32xf32> to vector<8x32xf32>
      %92 = vector.shape_cast %84 : vector<8x32xf32> to vector<1x8x32xf32>
      tpu.vector_store %arg12[%c0_60, %c0_61, %c0_62], %92 {strides = array<i32>} : memref<3x8x32xf32, #tpu.memory_space<vmem>>, vector<1x8x32xf32>,
      %c1_63 = arith.constant 1 : index
      %c0_64 = arith.constant 0 : index
      %c0_65 = arith.constant 0 : index
      %93 = vector.load %arg11[%c1_63, %c0_64, %c0_65] : memref<3x8x32xf32, #tpu.memory_space<vmem>>, vector<1x8x32xf32>
      %94 = vector.shape_cast %93 : vector<1x8x32xf32> to vector<8x32xf32>
      %c1_66 = arith.constant 1 : index
      %c0_67 = arith.constant 0 : index
      %c0_68 = arith.constant 0 : index
      %95 = vector.load %arg12[%c1_66, %c0_67, %c0_68] : memref<3x8x32xf32, #tpu.memory_space<vmem>>, vector<1x8x32xf32>
      %96 = vector.shape_cast %95 : vector<1x8x32xf32> to vector<8x32xf32>
      %97 = tpu.concatenate %86, %94 in 1 : vector<8x32xf32>, vector<8x32xf32> -> vector<8x64xf32>
      %98 = arith.truncf %97 : vector<8x64xf32> to vector<8x64xbf16>
      %c1_69 = arith.constant 1 : index
      %c0_70 = arith.constant 0 : index
      %c0_71 = arith.constant 0 : index
      %99 = vector.load %arg2[%c1_69, %c0_70, %c0_71] : memref<3x64x128xbf16, #tpu.memory_space<vmem>>, vector<1x64x128xbf16>
      %100 = vector.shape_cast %99 : vector<1x64x128xbf16> to vector<64x128xbf16>
      %cst_72 = arith.constant dense<0.000000e+00> : vector<8x128xf32>
      %101 = tpu.matmul %98, %100, %cst_72 {dimension_numbers = #tpu.dot_dimension_numbers<[1], [0], [0], [1], [0, 0, 1, 1], [], []>} : vector<8x64xbf16>, vector<64x128xbf16>, vector<8x128xf32> -> vector<8x128xf32>
      %c1_73 = arith.constant 1 : index
      %c0_74 = arith.constant 0 : index
      %c0_75 = arith.constant 0 : index
      %102 = vector.load %arg3[%c1_73, %c0_74, %c0_75] : memref<3x1x128xf32, #tpu.memory_space<vmem>>, vector<1x1x128xf32>
      %103 = vector.shape_cast %102 : vector<1x1x128xf32> to vector<1x128xf32>
      %104 = vector.broadcast %103 : vector<1x128xf32> to vector<8x128xf32>
      %105 = arith.addf %101, %104 : vector<8x128xf32>
      %106 = vector.extract_strided_slice %105 {offsets = [0, 0], sizes = [8, 32], strides = [1, 1]} : vector<8x128xf32> to vector<8x32xf32>
      %107 = arith.negf %106 : vector<8x32xf32>
      %108 = math.exp %107 : vector<8x32xf32>
      %cst_76 = arith.constant 1.000000e+00 : f32
      %109 = vector.broadcast %cst_76 : f32 to vector<8x32xf32>
      %110 = arith.addf %109, %108 : vector<8x32xf32>
      %111 = arith.divf %109, %110 : vector<8x32xf32>
      %112 = vector.extract_strided_slice %105 {offsets = [0, 32], sizes = [8, 32], strides = [1, 1]} : vector<8x128xf32> to vector<8x32xf32>
      %113 = arith.negf %112 : vector<8x32xf32>
      %114 = math.exp %113 : vector<8x32xf32>
      %cst_77 = arith.constant 1.000000e+00 : f32
      %115 = vector.broadcast %cst_77 : f32 to vector<8x32xf32>
      %116 = arith.addf %115, %114 : vector<8x32xf32>
      %117 = arith.divf %115, %116 : vector<8x32xf32>
      %118 = vector.extract_strided_slice %105 {offsets = [0, 64], sizes = [8, 32], strides = [1, 1]} : vector<8x128xf32> to vector<8x32xf32>
      %119 = math.tanh %118 : vector<8x32xf32>
      %120 = vector.extract_strided_slice %105 {offsets = [0, 96], sizes = [8, 32], strides = [1, 1]} : vector<8x128xf32> to vector<8x32xf32>
      %121 = arith.negf %120 : vector<8x32xf32>
      %122 = math.exp %121 : vector<8x32xf32>
      %cst_78 = arith.constant 1.000000e+00 : f32
      %123 = vector.broadcast %cst_78 : f32 to vector<8x32xf32>
      %124 = arith.addf %123, %122 : vector<8x32xf32>
      %125 = arith.divf %123, %124 : vector<8x32xf32>
      %126 = arith.mulf %117, %96 : vector<8x32xf32>
      %127 = arith.mulf %111, %119 : vector<8x32xf32>
      %128 = arith.addf %126, %127 : vector<8x32xf32>
      %129 = math.tanh %128 : vector<8x32xf32>
      %130 = arith.mulf %125, %129 : vector<8x32xf32>
      %c1_79 = arith.constant 1 : index
      %c0_80 = arith.constant 0 : index
      %c0_81 = arith.constant 0 : index
      %131 = vector.load %arg11[%c1_79, %c0_80, %c0_81] : memref<3x8x32xf32, #tpu.memory_space<vmem>>, vector<1x8x32xf32>
      %132 = vector.shape_cast %131 : vector<1x8x32xf32> to vector<8x32xf32>
      %133 = vector.shape_cast %130 : vector<8x32xf32> to vector<1x8x32xf32>
      tpu.vector_store %arg11[%c1_79, %c0_80, %c0_81], %133 {strides = array<i32>} : memref<3x8x32xf32, #tpu.memory_space<vmem>>, vector<1x8x32xf32>,
      %c1_82 = arith.constant 1 : index
      %c0_83 = arith.constant 0 : index
      %c0_84 = arith.constant 0 : index
      %134 = vector.load %arg12[%c1_82, %c0_83, %c0_84] : memref<3x8x32xf32, #tpu.memory_space<vmem>>, vector<1x8x32xf32>
      %135 = vector.shape_cast %134 : vector<1x8x32xf32> to vector<8x32xf32>
      %136 = vector.shape_cast %128 : vector<8x32xf32> to vector<1x8x32xf32>
      tpu.vector_store %arg12[%c1_82, %c0_83, %c0_84], %136 {strides = array<i32>} : memref<3x8x32xf32, #tpu.memory_space<vmem>>, vector<1x8x32xf32>,
      %c2_85 = arith.constant 2 : index
      %c0_86 = arith.constant 0 : index
      %c0_87 = arith.constant 0 : index
      %137 = vector.load %arg11[%c2_85, %c0_86, %c0_87] : memref<3x8x32xf32, #tpu.memory_space<vmem>>, vector<1x8x32xf32>
      %138 = vector.shape_cast %137 : vector<1x8x32xf32> to vector<8x32xf32>
      %c2_88 = arith.constant 2 : index
      %c0_89 = arith.constant 0 : index
      %c0_90 = arith.constant 0 : index
      %139 = vector.load %arg12[%c2_88, %c0_89, %c0_90] : memref<3x8x32xf32, #tpu.memory_space<vmem>>, vector<1x8x32xf32>
      %140 = vector.shape_cast %139 : vector<1x8x32xf32> to vector<8x32xf32>
      %141 = tpu.concatenate %130, %138 in 1 : vector<8x32xf32>, vector<8x32xf32> -> vector<8x64xf32>
      %142 = arith.truncf %141 : vector<8x64xf32> to vector<8x64xbf16>
      %c2_91 = arith.constant 2 : index
      %c0_92 = arith.constant 0 : index
      %c0_93 = arith.constant 0 : index
      %143 = vector.load %arg2[%c2_91, %c0_92, %c0_93] : memref<3x64x128xbf16, #tpu.memory_space<vmem>>, vector<1x64x128xbf16>
      %144 = vector.shape_cast %143 : vector<1x64x128xbf16> to vector<64x128xbf16>
      %cst_94 = arith.constant dense<0.000000e+00> : vector<8x128xf32>
      %145 = tpu.matmul %142, %144, %cst_94 {dimension_numbers = #tpu.dot_dimension_numbers<[1], [0], [0], [1], [0, 0, 1, 1], [], []>} : vector<8x64xbf16>, vector<64x128xbf16>, vector<8x128xf32> -> vector<8x128xf32>
      %c2_95 = arith.constant 2 : index
      %c0_96 = arith.constant 0 : index
      %c0_97 = arith.constant 0 : index
      %146 = vector.load %arg3[%c2_95, %c0_96, %c0_97] : memref<3x1x128xf32, #tpu.memory_space<vmem>>, vector<1x1x128xf32>
      %147 = vector.shape_cast %146 : vector<1x1x128xf32> to vector<1x128xf32>
      %148 = vector.broadcast %147 : vector<1x128xf32> to vector<8x128xf32>
      %149 = arith.addf %145, %148 : vector<8x128xf32>
      %150 = vector.extract_strided_slice %149 {offsets = [0, 0], sizes = [8, 32], strides = [1, 1]} : vector<8x128xf32> to vector<8x32xf32>
      %151 = arith.negf %150 : vector<8x32xf32>
      %152 = math.exp %151 : vector<8x32xf32>
      %cst_98 = arith.constant 1.000000e+00 : f32
      %153 = vector.broadcast %cst_98 : f32 to vector<8x32xf32>
      %154 = arith.addf %153, %152 : vector<8x32xf32>
      %155 = arith.divf %153, %154 : vector<8x32xf32>
      %156 = vector.extract_strided_slice %149 {offsets = [0, 32], sizes = [8, 32], strides = [1, 1]} : vector<8x128xf32> to vector<8x32xf32>
      %157 = arith.negf %156 : vector<8x32xf32>
      %158 = math.exp %157 : vector<8x32xf32>
      %cst_99 = arith.constant 1.000000e+00 : f32
      %159 = vector.broadcast %cst_99 : f32 to vector<8x32xf32>
      %160 = arith.addf %159, %158 : vector<8x32xf32>
      %161 = arith.divf %159, %160 : vector<8x32xf32>
      %162 = vector.extract_strided_slice %149 {offsets = [0, 64], sizes = [8, 32], strides = [1, 1]} : vector<8x128xf32> to vector<8x32xf32>
      %163 = math.tanh %162 : vector<8x32xf32>
      %164 = vector.extract_strided_slice %149 {offsets = [0, 96], sizes = [8, 32], strides = [1, 1]} : vector<8x128xf32> to vector<8x32xf32>
      %165 = arith.negf %164 : vector<8x32xf32>
      %166 = math.exp %165 : vector<8x32xf32>
      %cst_100 = arith.constant 1.000000e+00 : f32
      %167 = vector.broadcast %cst_100 : f32 to vector<8x32xf32>
      %168 = arith.addf %167, %166 : vector<8x32xf32>
      %169 = arith.divf %167, %168 : vector<8x32xf32>
      %170 = arith.mulf %161, %140 : vector<8x32xf32>
      %171 = arith.mulf %155, %163 : vector<8x32xf32>
      %172 = arith.addf %170, %171 : vector<8x32xf32>
      %173 = math.tanh %172 : vector<8x32xf32>
      %174 = arith.mulf %169, %173 : vector<8x32xf32>
      %c2_101 = arith.constant 2 : index
      %c0_102 = arith.constant 0 : index
      %c0_103 = arith.constant 0 : index
      %175 = vector.load %arg11[%c2_101, %c0_102, %c0_103] : memref<3x8x32xf32, #tpu.memory_space<vmem>>, vector<1x8x32xf32>
      %176 = vector.shape_cast %175 : vector<1x8x32xf32> to vector<8x32xf32>
      %177 = vector.shape_cast %174 : vector<8x32xf32> to vector<1x8x32xf32>
      tpu.vector_store %arg11[%c2_101, %c0_102, %c0_103], %177 {strides = array<i32>} : memref<3x8x32xf32, #tpu.memory_space<vmem>>, vector<1x8x32xf32>,
      %c2_104 = arith.constant 2 : index
      %c0_105 = arith.constant 0 : index
      %c0_106 = arith.constant 0 : index
      %178 = vector.load %arg12[%c2_104, %c0_105, %c0_106] : memref<3x8x32xf32, #tpu.memory_space<vmem>>, vector<1x8x32xf32>
      %179 = vector.shape_cast %178 : vector<1x8x32xf32> to vector<8x32xf32>
      %180 = vector.shape_cast %172 : vector<8x32xf32> to vector<1x8x32xf32>
      tpu.vector_store %arg12[%c2_104, %c0_105, %c0_106], %180 {strides = array<i32>} : memref<3x8x32xf32, #tpu.memory_space<vmem>>, vector<1x8x32xf32>,
    }
    %c8_i32_33 = arith.constant 8 : i32
    %c0_i32_34 = arith.constant 0 : i32
    %c8_i32_35 = arith.constant 8 : i32
    %43 = arith.addi %c0_i32_34, %c8_i32_35 : i32
    %c1_i32_36 = arith.constant 1 : i32
    scf.for %arg13 = %c0_i32_34 to %43 step %c1_i32_36  : i32 {
      %c1_i32_38 = arith.constant 1 : i32
      %44 = arith.muli %arg13, %c1_i32_38 : i32
      %c0_i32_39 = arith.constant 0 : i32
      %45 = arith.addi %c0_i32_39, %44 : i32
      %46 = arith.index_cast %45 : i32 to index
      %c0_40 = arith.constant 0 : index
      %c0_41 = arith.constant 0 : index
      %47 = vector.load %arg1[%46, %c0_40, %c0_41] : memref<8x8x32xf32, #tpu.memory_space<vmem>>, vector<1x8x32xf32>
      %48 = vector.shape_cast %47 : vector<1x8x32xf32> to vector<8x32xf32>
      %c0_42 = arith.constant 0 : index
      %c0_43 = arith.constant 0 : index
      %c0_44 = arith.constant 0 : index
      %49 = vector.load %arg11[%c0_42, %c0_43, %c0_44] : memref<3x8x32xf32, #tpu.memory_space<vmem>>, vector<1x8x32xf32>
      %50 = vector.shape_cast %49 : vector<1x8x32xf32> to vector<8x32xf32>
      %c0_45 = arith.constant 0 : index
      %c0_46 = arith.constant 0 : index
      %c0_47 = arith.constant 0 : index
      %51 = vector.load %arg12[%c0_45, %c0_46, %c0_47] : memref<3x8x32xf32, #tpu.memory_space<vmem>>, vector<1x8x32xf32>
      %52 = vector.shape_cast %51 : vector<1x8x32xf32> to vector<8x32xf32>
      %53 = tpu.concatenate %48, %50 in 1 : vector<8x32xf32>, vector<8x32xf32> -> vector<8x64xf32>
      %54 = arith.truncf %53 : vector<8x64xf32> to vector<8x64xbf16>
      %c0_48 = arith.constant 0 : index
      %c0_49 = arith.constant 0 : index
      %c0_50 = arith.constant 0 : index
      %55 = vector.load %arg4[%c0_48, %c0_49, %c0_50] : memref<3x64x128xbf16, #tpu.memory_space<vmem>>, vector<1x64x128xbf16>
      %56 = vector.shape_cast %55 : vector<1x64x128xbf16> to vector<64x128xbf16>
      %cst = arith.constant dense<0.000000e+00> : vector<8x128xf32>
      %57 = tpu.matmul %54, %56, %cst {dimension_numbers = #tpu.dot_dimension_numbers<[1], [0], [0], [1], [0, 0, 1, 1], [], []>} : vector<8x64xbf16>, vector<64x128xbf16>, vector<8x128xf32> -> vector<8x128xf32>
      %c0_51 = arith.constant 0 : index
      %c0_52 = arith.constant 0 : index
      %c0_53 = arith.constant 0 : index
      %58 = vector.load %arg5[%c0_51, %c0_52, %c0_53] : memref<3x1x128xf32, #tpu.memory_space<vmem>>, vector<1x1x128xf32>
      %59 = vector.shape_cast %58 : vector<1x1x128xf32> to vector<1x128xf32>
      %60 = vector.broadcast %59 : vector<1x128xf32> to vector<8x128xf32>
      %61 = arith.addf %57, %60 : vector<8x128xf32>
      %62 = vector.extract_strided_slice %61 {offsets = [0, 0], sizes = [8, 32], strides = [1, 1]} : vector<8x128xf32> to vector<8x32xf32>
      %63 = arith.negf %62 : vector<8x32xf32>
      %64 = math.exp %63 : vector<8x32xf32>
      %cst_54 = arith.constant 1.000000e+00 : f32
      %65 = vector.broadcast %cst_54 : f32 to vector<8x32xf32>
      %66 = arith.addf %65, %64 : vector<8x32xf32>
      %67 = arith.divf %65, %66 : vector<8x32xf32>
      %68 = vector.extract_strided_slice %61 {offsets = [0, 32], sizes = [8, 32], strides = [1, 1]} : vector<8x128xf32> to vector<8x32xf32>
      %69 = arith.negf %68 : vector<8x32xf32>
      %70 = math.exp %69 : vector<8x32xf32>
      %cst_55 = arith.constant 1.000000e+00 : f32
      %71 = vector.broadcast %cst_55 : f32 to vector<8x32xf32>
      %72 = arith.addf %71, %70 : vector<8x32xf32>
      %73 = arith.divf %71, %72 : vector<8x32xf32>
      %74 = vector.extract_strided_slice %61 {offsets = [0, 64], sizes = [8, 32], strides = [1, 1]} : vector<8x128xf32> to vector<8x32xf32>
      %75 = math.tanh %74 : vector<8x32xf32>
      %76 = vector.extract_strided_slice %61 {offsets = [0, 96], sizes = [8, 32], strides = [1, 1]} : vector<8x128xf32> to vector<8x32xf32>
      %77 = arith.negf %76 : vector<8x32xf32>
      %78 = math.exp %77 : vector<8x32xf32>
      %cst_56 = arith.constant 1.000000e+00 : f32
      %79 = vector.broadcast %cst_56 : f32 to vector<8x32xf32>
      %80 = arith.addf %79, %78 : vector<8x32xf32>
      %81 = arith.divf %79, %80 : vector<8x32xf32>
      %82 = arith.mulf %73, %52 : vector<8x32xf32>
      %83 = arith.mulf %67, %75 : vector<8x32xf32>
      %84 = arith.addf %82, %83 : vector<8x32xf32>
      %85 = math.tanh %84 : vector<8x32xf32>
      %86 = arith.mulf %81, %85 : vector<8x32xf32>
      %c0_57 = arith.constant 0 : index
      %c0_58 = arith.constant 0 : index
      %c0_59 = arith.constant 0 : index
      %87 = vector.load %arg11[%c0_57, %c0_58, %c0_59] : memref<3x8x32xf32, #tpu.memory_space<vmem>>, vector<1x8x32xf32>
      %88 = vector.shape_cast %87 : vector<1x8x32xf32> to vector<8x32xf32>
      %89 = vector.shape_cast %86 : vector<8x32xf32> to vector<1x8x32xf32>
      tpu.vector_store %arg11[%c0_57, %c0_58, %c0_59], %89 {strides = array<i32>} : memref<3x8x32xf32, #tpu.memory_space<vmem>>, vector<1x8x32xf32>,
      %c0_60 = arith.constant 0 : index
      %c0_61 = arith.constant 0 : index
      %c0_62 = arith.constant 0 : index
      %90 = vector.load %arg12[%c0_60, %c0_61, %c0_62] : memref<3x8x32xf32, #tpu.memory_space<vmem>>, vector<1x8x32xf32>
      %91 = vector.shape_cast %90 : vector<1x8x32xf32> to vector<8x32xf32>
      %92 = vector.shape_cast %84 : vector<8x32xf32> to vector<1x8x32xf32>
      tpu.vector_store %arg12[%c0_60, %c0_61, %c0_62], %92 {strides = array<i32>} : memref<3x8x32xf32, #tpu.memory_space<vmem>>, vector<1x8x32xf32>,
      %c1_63 = arith.constant 1 : index
      %c0_64 = arith.constant 0 : index
      %c0_65 = arith.constant 0 : index
      %93 = vector.load %arg11[%c1_63, %c0_64, %c0_65] : memref<3x8x32xf32, #tpu.memory_space<vmem>>, vector<1x8x32xf32>
      %94 = vector.shape_cast %93 : vector<1x8x32xf32> to vector<8x32xf32>
      %c1_66 = arith.constant 1 : index
      %c0_67 = arith.constant 0 : index
      %c0_68 = arith.constant 0 : index
      %95 = vector.load %arg12[%c1_66, %c0_67, %c0_68] : memref<3x8x32xf32, #tpu.memory_space<vmem>>, vector<1x8x32xf32>
      %96 = vector.shape_cast %95 : vector<1x8x32xf32> to vector<8x32xf32>
      %97 = tpu.concatenate %86, %94 in 1 : vector<8x32xf32>, vector<8x32xf32> -> vector<8x64xf32>
      %98 = arith.truncf %97 : vector<8x64xf32> to vector<8x64xbf16>
      %c1_69 = arith.constant 1 : index
      %c0_70 = arith.constant 0 : index
      %c0_71 = arith.constant 0 : index
      %99 = vector.load %arg4[%c1_69, %c0_70, %c0_71] : memref<3x64x128xbf16, #tpu.memory_space<vmem>>, vector<1x64x128xbf16>
      %100 = vector.shape_cast %99 : vector<1x64x128xbf16> to vector<64x128xbf16>
      %cst_72 = arith.constant dense<0.000000e+00> : vector<8x128xf32>
      %101 = tpu.matmul %98, %100, %cst_72 {dimension_numbers = #tpu.dot_dimension_numbers<[1], [0], [0], [1], [0, 0, 1, 1], [], []>} : vector<8x64xbf16>, vector<64x128xbf16>, vector<8x128xf32> -> vector<8x128xf32>
      %c1_73 = arith.constant 1 : index
      %c0_74 = arith.constant 0 : index
      %c0_75 = arith.constant 0 : index
      %102 = vector.load %arg5[%c1_73, %c0_74, %c0_75] : memref<3x1x128xf32, #tpu.memory_space<vmem>>, vector<1x1x128xf32>
      %103 = vector.shape_cast %102 : vector<1x1x128xf32> to vector<1x128xf32>
      %104 = vector.broadcast %103 : vector<1x128xf32> to vector<8x128xf32>
      %105 = arith.addf %101, %104 : vector<8x128xf32>
      %106 = vector.extract_strided_slice %105 {offsets = [0, 0], sizes = [8, 32], strides = [1, 1]} : vector<8x128xf32> to vector<8x32xf32>
      %107 = arith.negf %106 : vector<8x32xf32>
      %108 = math.exp %107 : vector<8x32xf32>
      %cst_76 = arith.constant 1.000000e+00 : f32
      %109 = vector.broadcast %cst_76 : f32 to vector<8x32xf32>
      %110 = arith.addf %109, %108 : vector<8x32xf32>
      %111 = arith.divf %109, %110 : vector<8x32xf32>
      %112 = vector.extract_strided_slice %105 {offsets = [0, 32], sizes = [8, 32], strides = [1, 1]} : vector<8x128xf32> to vector<8x32xf32>
      %113 = arith.negf %112 : vector<8x32xf32>
      %114 = math.exp %113 : vector<8x32xf32>
      %cst_77 = arith.constant 1.000000e+00 : f32
      %115 = vector.broadcast %cst_77 : f32 to vector<8x32xf32>
      %116 = arith.addf %115, %114 : vector<8x32xf32>
      %117 = arith.divf %115, %116 : vector<8x32xf32>
      %118 = vector.extract_strided_slice %105 {offsets = [0, 64], sizes = [8, 32], strides = [1, 1]} : vector<8x128xf32> to vector<8x32xf32>
      %119 = math.tanh %118 : vector<8x32xf32>
      %120 = vector.extract_strided_slice %105 {offsets = [0, 96], sizes = [8, 32], strides = [1, 1]} : vector<8x128xf32> to vector<8x32xf32>
      %121 = arith.negf %120 : vector<8x32xf32>
      %122 = math.exp %121 : vector<8x32xf32>
      %cst_78 = arith.constant 1.000000e+00 : f32
      %123 = vector.broadcast %cst_78 : f32 to vector<8x32xf32>
      %124 = arith.addf %123, %122 : vector<8x32xf32>
      %125 = arith.divf %123, %124 : vector<8x32xf32>
      %126 = arith.mulf %117, %96 : vector<8x32xf32>
      %127 = arith.mulf %111, %119 : vector<8x32xf32>
      %128 = arith.addf %126, %127 : vector<8x32xf32>
      %129 = math.tanh %128 : vector<8x32xf32>
      %130 = arith.mulf %125, %129 : vector<8x32xf32>
      %c1_79 = arith.constant 1 : index
      %c0_80 = arith.constant 0 : index
      %c0_81 = arith.constant 0 : index
      %131 = vector.load %arg11[%c1_79, %c0_80, %c0_81] : memref<3x8x32xf32, #tpu.memory_space<vmem>>, vector<1x8x32xf32>
      %132 = vector.shape_cast %131 : vector<1x8x32xf32> to vector<8x32xf32>
      %133 = vector.shape_cast %130 : vector<8x32xf32> to vector<1x8x32xf32>
      tpu.vector_store %arg11[%c1_79, %c0_80, %c0_81], %133 {strides = array<i32>} : memref<3x8x32xf32, #tpu.memory_space<vmem>>, vector<1x8x32xf32>,
      %c1_82 = arith.constant 1 : index
      %c0_83 = arith.constant 0 : index
      %c0_84 = arith.constant 0 : index
      %134 = vector.load %arg12[%c1_82, %c0_83, %c0_84] : memref<3x8x32xf32, #tpu.memory_space<vmem>>, vector<1x8x32xf32>
      %135 = vector.shape_cast %134 : vector<1x8x32xf32> to vector<8x32xf32>
      %136 = vector.shape_cast %128 : vector<8x32xf32> to vector<1x8x32xf32>
      tpu.vector_store %arg12[%c1_82, %c0_83, %c0_84], %136 {strides = array<i32>} : memref<3x8x32xf32, #tpu.memory_space<vmem>>, vector<1x8x32xf32>,
      %c2_85 = arith.constant 2 : index
      %c0_86 = arith.constant 0 : index
      %c0_87 = arith.constant 0 : index
      %137 = vector.load %arg11[%c2_85, %c0_86, %c0_87] : memref<3x8x32xf32, #tpu.memory_space<vmem>>, vector<1x8x32xf32>
      %138 = vector.shape_cast %137 : vector<1x8x32xf32> to vector<8x32xf32>
      %c2_88 = arith.constant 2 : index
      %c0_89 = arith.constant 0 : index
      %c0_90 = arith.constant 0 : index
      %139 = vector.load %arg12[%c2_88, %c0_89, %c0_90] : memref<3x8x32xf32, #tpu.memory_space<vmem>>, vector<1x8x32xf32>
      %140 = vector.shape_cast %139 : vector<1x8x32xf32> to vector<8x32xf32>
      %141 = tpu.concatenate %130, %138 in 1 : vector<8x32xf32>, vector<8x32xf32> -> vector<8x64xf32>
      %142 = arith.truncf %141 : vector<8x64xf32> to vector<8x64xbf16>
      %c2_91 = arith.constant 2 : index
      %c0_92 = arith.constant 0 : index
      %c0_93 = arith.constant 0 : index
      %143 = vector.load %arg4[%c2_91, %c0_92, %c0_93] : memref<3x64x128xbf16, #tpu.memory_space<vmem>>, vector<1x64x128xbf16>
      %144 = vector.shape_cast %143 : vector<1x64x128xbf16> to vector<64x128xbf16>
      %cst_94 = arith.constant dense<0.000000e+00> : vector<8x128xf32>
      %145 = tpu.matmul %142, %144, %cst_94 {dimension_numbers = #tpu.dot_dimension_numbers<[1], [0], [0], [1], [0, 0, 1, 1], [], []>} : vector<8x64xbf16>, vector<64x128xbf16>, vector<8x128xf32> -> vector<8x128xf32>
      %c2_95 = arith.constant 2 : index
      %c0_96 = arith.constant 0 : index
      %c0_97 = arith.constant 0 : index
      %146 = vector.load %arg5[%c2_95, %c0_96, %c0_97] : memref<3x1x128xf32, #tpu.memory_space<vmem>>, vector<1x1x128xf32>
      %147 = vector.shape_cast %146 : vector<1x1x128xf32> to vector<1x128xf32>
      %148 = vector.broadcast %147 : vector<1x128xf32> to vector<8x128xf32>
      %149 = arith.addf %145, %148 : vector<8x128xf32>
      %150 = vector.extract_strided_slice %149 {offsets = [0, 0], sizes = [8, 32], strides = [1, 1]} : vector<8x128xf32> to vector<8x32xf32>
      %151 = arith.negf %150 : vector<8x32xf32>
      %152 = math.exp %151 : vector<8x32xf32>
      %cst_98 = arith.constant 1.000000e+00 : f32
      %153 = vector.broadcast %cst_98 : f32 to vector<8x32xf32>
      %154 = arith.addf %153, %152 : vector<8x32xf32>
      %155 = arith.divf %153, %154 : vector<8x32xf32>
      %156 = vector.extract_strided_slice %149 {offsets = [0, 32], sizes = [8, 32], strides = [1, 1]} : vector<8x128xf32> to vector<8x32xf32>
      %157 = arith.negf %156 : vector<8x32xf32>
      %158 = math.exp %157 : vector<8x32xf32>
      %cst_99 = arith.constant 1.000000e+00 : f32
      %159 = vector.broadcast %cst_99 : f32 to vector<8x32xf32>
      %160 = arith.addf %159, %158 : vector<8x32xf32>
      %161 = arith.divf %159, %160 : vector<8x32xf32>
      %162 = vector.extract_strided_slice %149 {offsets = [0, 64], sizes = [8, 32], strides = [1, 1]} : vector<8x128xf32> to vector<8x32xf32>
      %163 = math.tanh %162 : vector<8x32xf32>
      %164 = vector.extract_strided_slice %149 {offsets = [0, 96], sizes = [8, 32], strides = [1, 1]} : vector<8x128xf32> to vector<8x32xf32>
      %165 = arith.negf %164 : vector<8x32xf32>
      %166 = math.exp %165 : vector<8x32xf32>
      %cst_100 = arith.constant 1.000000e+00 : f32
      %167 = vector.broadcast %cst_100 : f32 to vector<8x32xf32>
      %168 = arith.addf %167, %166 : vector<8x32xf32>
      %169 = arith.divf %167, %168 : vector<8x32xf32>
      %170 = arith.mulf %161, %140 : vector<8x32xf32>
      %171 = arith.mulf %155, %163 : vector<8x32xf32>
      %172 = arith.addf %170, %171 : vector<8x32xf32>
      %173 = math.tanh %172 : vector<8x32xf32>
      %174 = arith.mulf %169, %173 : vector<8x32xf32>
      %c2_101 = arith.constant 2 : index
      %c0_102 = arith.constant 0 : index
      %c0_103 = arith.constant 0 : index
      %175 = vector.load %arg11[%c2_101, %c0_102, %c0_103] : memref<3x8x32xf32, #tpu.memory_space<vmem>>, vector<1x8x32xf32>
      %176 = vector.shape_cast %175 : vector<1x8x32xf32> to vector<8x32xf32>
      %177 = vector.shape_cast %174 : vector<8x32xf32> to vector<1x8x32xf32>
      tpu.vector_store %arg11[%c2_101, %c0_102, %c0_103], %177 {strides = array<i32>} : memref<3x8x32xf32, #tpu.memory_space<vmem>>, vector<1x8x32xf32>,
      %c2_104 = arith.constant 2 : index
      %c0_105 = arith.constant 0 : index
      %c0_106 = arith.constant 0 : index
      %178 = vector.load %arg12[%c2_104, %c0_105, %c0_106] : memref<3x8x32xf32, #tpu.memory_space<vmem>>, vector<1x8x32xf32>
      %179 = vector.shape_cast %178 : vector<1x8x32xf32> to vector<8x32xf32>
      %180 = vector.shape_cast %172 : vector<8x32xf32> to vector<1x8x32xf32>
      tpu.vector_store %arg12[%c2_104, %c0_105, %c0_106], %180 {strides = array<i32>} : memref<3x8x32xf32, #tpu.memory_space<vmem>>, vector<1x8x32xf32>,
      %181 = arith.truncf %174 : vector<8x32xf32> to vector<8x32xbf16>
      %c0_107 = arith.constant 0 : index
      %c0_108 = arith.constant 0 : index
      %182 = vector.load %arg8[%c0_107, %c0_108] : memref<32x128xbf16, #tpu.memory_space<vmem>>, vector<32x128xbf16>
      %cst_109 = arith.constant dense<0.000000e+00> : vector<8x128xf32>
      %183 = tpu.matmul %181, %182, %cst_109 {dimension_numbers = #tpu.dot_dimension_numbers<[1], [0], [0], [1], [0, 0, 1, 1], [], []>} : vector<8x32xbf16>, vector<32x128xbf16>, vector<8x128xf32> -> vector<8x128xf32>
      %c0_110 = arith.constant 0 : index
      %c0_111 = arith.constant 0 : index
      %184 = vector.load %arg9[%c0_110, %c0_111] : memref<1x128xf32, #tpu.memory_space<vmem>>, vector<1x128xf32>
      %185 = vector.broadcast %184 : vector<1x128xf32> to vector<8x128xf32>
      %186 = arith.addf %183, %185 : vector<8x128xf32>
      %187 = arith.index_cast %45 : i32 to index
      %c0_112 = arith.constant 0 : index
      %c0_113 = arith.constant 0 : index
      %188 = vector.load %arg10[%187, %c0_112, %c0_113] : memref<8x8x128xf32, #tpu.memory_space<vmem>>, vector<1x8x128xf32>
      %189 = vector.shape_cast %188 : vector<1x8x128xf32> to vector<8x128xf32>
      %190 = vector.shape_cast %186 : vector<8x128xf32> to vector<1x8x128xf32>
      tpu.vector_store %arg10[%187, %c0_112, %c0_113], %190 {strides = array<i32>} : memref<8x8x128xf32, #tpu.memory_space<vmem>>, vector<1x8x128xf32>,
    }
    %c8_i32_37 = arith.constant 8 : i32
    return
  }
}

</mosaic_0001>

<llo_original>
// kernel: seq2seq_forward.1
$region0: #{seq2seq_forward.1}
  #allocation0 [shape = 'u32[]', space=smem, size = 0x4, offset = 0x4, fixed_abs, tag = 'smem constant byte address 0x4 - core index']
  #allocation1 [shape = 'u32[144,128]{1,0:T(1,128)}', space=vmem, size = 0x12000, scoped, tag = 'internal scratch']
  #allocation2 [shape = 'f32[3,8,32]{2,1,0:T(8,128)}', space=vmem, size = 0x3000, scoped, tag = 'scratch operand']
  #allocation3 [shape = 'f32[3,8,32]{2,1,0:T(8,128)}', space=vmem, size = 0x3000, scoped, tag = 'scratch operand']
  %s0 = inlined_call_operand.vmem [shape: f32[8,8,32], index: 0, kind: input, shape index: {}]
  %s1 = inlined_call_operand.vmem [shape: f32[8,8,32], index: 1, kind: input, shape index: {}]
  %s2 = inlined_call_operand.vmem [shape: bf16[3,64,128], index: 2, kind: input, shape index: {}]
  %s3 = inlined_call_operand.vmem [shape: f32[3,1,128], index: 3, kind: input, shape index: {}]
  %s4 = inlined_call_operand.vmem [shape: bf16[3,64,128], index: 4, kind: input, shape index: {}]
  %s5 = inlined_call_operand.vmem [shape: f32[3,1,128], index: 5, kind: input, shape index: {}]
  %s6 = inlined_call_operand.vmem [shape: f32[3,1,32], index: 6, kind: input, shape index: {}]
  %s7 = inlined_call_operand.vmem [shape: f32[3,1,32], index: 7, kind: input, shape index: {}]
  %s8 = inlined_call_operand.vmem [shape: bf16[32,128], index: 8, kind: input, shape index: {}]
  %s9 = inlined_call_operand.vmem [shape: f32[1,128], index: 9, kind: input, shape index: {}]
  %s10 = inlined_call_operand.vmem [shape: f32[8,8,128], index: 10, kind: output, shape index: {}]
  %s11 = sld [smem:[#allocation0]]
  $region64: #{seq2seq_forward.1} parent=0
    _
  %s13 = ssub.s32 1, %s11
  %s14 = scalar_select 0, %s13, %s11
  // Predicated region
  $region2: #{seq2seq_forward.1} parent=0 // pred_check
    _
  $region3: #{seq2seq_forward.1} parent=0 // pred_check_branch
    %16 = sbr.rel (0) target = $region5
  $region4: #{seq2seq_forward.1} parent=0 // pred_region
    _
  $region5: #{seq2seq_forward.1} parent=0 // pred_fallthru
    _
  // Predicated region
  $region6: #{seq2seq_forward.1} parent=0 // pred_check
    _
  $region7: #{seq2seq_forward.1} parent=0 // pred_check_branch
    %18 = sbr.rel (0) target = $region9
  $region8: #{seq2seq_forward.1} parent=0 // pred_region
    _
  $region9: #{seq2seq_forward.1} parent=0 // pred_fallthru
    _
  // Predicated region
  $region10: #{seq2seq_forward.1} parent=0 // pred_check
    _
  $region11: #{seq2seq_forward.1} parent=0 // pred_check_branch
    %20 = sbr.rel (0) target = $region13
  $region12: #{seq2seq_forward.1} parent=0 // pred_region
    _
  $region13: #{seq2seq_forward.1} parent=0 // pred_fallthru
    _
  // Predicated region
  $region14: #{seq2seq_forward.1} parent=0 // pred_check
    _
  $region15: #{seq2seq_forward.1} parent=0 // pred_check_branch
    %22 = sbr.rel (0) target = $region17
  $region16: #{seq2seq_forward.1} parent=0 // pred_region
    _
  $region17: #{seq2seq_forward.1} parent=0 // pred_fallthru
    _
  // Predicated region
  $region18: #{seq2seq_forward.1} parent=0 // pred_check
    _
  $region19: #{seq2seq_forward.1} parent=0 // pred_check_branch
    %24 = sbr.rel (0) target = $region21
  $region20: #{seq2seq_forward.1} parent=0 // pred_region
    _
  $region21: #{seq2seq_forward.1} parent=0 // pred_fallthru
    _
  // Predicated region
  $region22: #{seq2seq_forward.1} parent=0 // pred_check
    _
  $region23: #{seq2seq_forward.1} parent=0 // pred_check_branch
    %26 = sbr.rel (0) target = $region25
  $region24: #{seq2seq_forward.1} parent=0 // pred_region
    _
  $region25: #{seq2seq_forward.1} parent=0 // pred_fallthru
    _
  // Predicated region
  $region26: #{seq2seq_forward.1} parent=0 // pred_check
    _
  $region27: #{seq2seq_forward.1} parent=0 // pred_check_branch
    %28 = sbr.rel (0) target = $region29
  $region28: #{seq2seq_forward.1} parent=0 // pred_region
    _
  $region29: #{seq2seq_forward.1} parent=0 // pred_fallthru
    _
  // Predicated region
  $region30: #{seq2seq_forward.1} parent=0 // pred_check
    _
  $region31: #{seq2seq_forward.1} parent=0 // pred_check_branch
    %30 = sbr.rel (0) target = $region33
  $region32: #{seq2seq_forward.1} parent=0 // pred_region
    _
  $region33: #{seq2seq_forward.1} parent=0 // pred_fallthru
    _
  // Predicated region
  $region34: #{seq2seq_forward.1} parent=0 // pred_check
    _
  $region35: #{seq2seq_forward.1} parent=0 // pred_check_branch
    %32 = sbr.rel (0) target = $region37
  $region36: #{seq2seq_forward.1} parent=0 // pred_region
    _
  $region37: #{seq2seq_forward.1} parent=0 // pred_fallthru
    _
  // Predicated region
  $region38: #{seq2seq_forward.1} parent=0 // pred_check
    _
  $region39: #{seq2seq_forward.1} parent=0 // pred_check_branch
    %34 = sbr.rel (0) target = $region41
  $region40: #{seq2seq_forward.1} parent=0 // pred_region
    _
  $region41: #{seq2seq_forward.1} parent=0 // pred_fallthru
    _
  %v36 = vld [vmem:[%s6] sm:$0x1]
  %v38 = vlaneseq
  %v39 = vshrl.u32 %v38, 7
  %v40 = vsub.s32 0, %v39
  %v41 = vrot.slane %v36, %v40
  %vm43 = vcmask 261120
  %44 = vst.msk [vmem:[#allocation2] sm:$0xff] %vm43, %v41
  %v45 = vld [vmem:[%s7] sm:$0x1]
  %v47 = vlaneseq
  %v48 = vshrl.u32 %v47, 7
  %v49 = vsub.s32 0, %v48
  %v50 = vrot.slane %v45, %v49
  %52 = vst.msk [vmem:[#allocation3] sm:$0xff] %vm43, %v50
  %s53 = scalar_lea.vmem %s6, 1
  %v54 = vld [vmem:[%s53] sm:$0x1]
  %v56 = vlaneseq
  %v57 = vshrl.u32 %v56, 7
  %v58 = vsub.s32 0, %v57
  %v59 = vrot.slane %v54, %v58
  %s61 = scalar_lea.vmem [#allocation2], 8
  %62 = vst.msk [vmem:[%s61] sm:$0xff] %vm43, %v59
  %s63 = scalar_lea.vmem %s7, 1
  %v64 = vld [vmem:[%s63] sm:$0x1]
  %v66 = vlaneseq
  %v67 = vshrl.u32 %v66, 7
  %v68 = vsub.s32 0, %v67
  %v69 = vrot.slane %v64, %v68
  %s71 = scalar_lea.vmem [#allocation3], 8
  %72 = vst.msk [vmem:[%s71] sm:$0xff] %vm43, %v69
  %s73 = scalar_lea.vmem %s6, 2
  %v74 = vld [vmem:[%s73] sm:$0x1]
  %v76 = vlaneseq
  %v77 = vshrl.u32 %v76, 7
  %v78 = vsub.s32 0, %v77
  %v79 = vrot.slane %v74, %v78
  %s81 = scalar_lea.vmem [#allocation2], 16
  %82 = vst.msk [vmem:[%s81] sm:$0xff] %vm43, %v79
  %s83 = scalar_lea.vmem %s7, 2
  %v84 = vld [vmem:[%s83] sm:$0x1]
  %v86 = vlaneseq
  %v87 = vshrl.u32 %v86, 7
  %v88 = vsub.s32 0, %v87
  %v89 = vrot.slane %v84, %v88
  %s91 = scalar_lea.vmem [#allocation3], 16
  %92 = vst.msk [vmem:[%s91] sm:$0xff] %vm43, %v89
  loop: start=0, step=1, limit=8
  $region42: #{seq2seq_forward.1} parent=0 // loop_pre_header
    _
  $region43: #{seq2seq_forward.1} parent=0 // loop_header
    %s94 = sphi 0, %s98
    %p95 = scmp.ge.s32.totalorder %s94, 8
  $region44: #{seq2seq_forward.1} parent=0 // loop_header_branch
    %97 = sbr.rel (%p95) target = $region48
  $region45: #{seq2seq_forward.1} parent=0 // loop_body
    %s99 = smul.u32 %s94, 8
    %s100 = scalar_lea.vmem %s0, %s99
    %v101 = vld [vmem:[%s100] sm:$0xff]
    %v102 = vld [vmem:[#allocation2] sm:$0xff]
    %v103 = vld [vmem:[#allocation3] sm:$0xff]
    %105 = vrot.lane.b32.xlu0 %v102, 32
    %v106 = vpop.permute.xlu0 %105
    %v108 = vsel %vm43, %v101, %v106
    %v109 = vpack.c.bf16 %v108, %v108
    %v110 = vld [vmem:[%s2] sm:$0xf]
    %v111 = vld [vmem:[%s2 + $0x4] sm:$0xf]
    %v112 = vld [vmem:[%s2 + $0x8] sm:$0xf]
    %v113 = vld [vmem:[%s2 + $0xc] sm:$0xf]
    %v114 = vld [vmem:[%s2 + $0x10] sm:$0xf]
    %v115 = vld [vmem:[%s2 + $0x14] sm:$0xf]
    %v116 = vld [vmem:[%s2 + $0x18] sm:$0xf]
    %v117 = vld [vmem:[%s2 + $0x1c] sm:$0xf]
    %v118 = vld [vmem:[%s3] sm:$0x1]
    %v120 = vlaneseq
    %v121 = vshrl.u32 %v120, 7
    %v122 = vsub.s32 0, %v121
    %v123 = vrot.slane %v118, %v122
    %v133 = vunpack.c.l.b16 %v110
    %v134 = vunpack.c.l.b16 %v111
    %v135 = vunpack.c.l.b16 %v112
    %v136 = vunpack.c.l.b16 %v113
    %v137 = vunpack.c.l.b16 %v114
    %v138 = vunpack.c.l.b16 %v115
    %v139 = vunpack.c.l.b16 %v116
    %v140 = vunpack.c.l.b16 %v117
    %v141 = vpack.c.b16 %v134, %v133
    %v142 = vpack.c.b16 %v136, %v135
    %v143 = vpack.c.b16 %v138, %v137
    %v144 = vpack.c.b16 %v140, %v139
    %vm149 = vcmask 523264
    %v151 = vsel %vm149, %v109, 0
    %153 = vmatprep.subr.bf16.mxu0 0
    %154 = vmatpush1.bf16.msra.mxu0 %v141
    %155 = vmatprep.subr.bf16.mxu0 0
    %156 = vmatpush1.bf16.msra.mxu0 %v142
    %157 = vmatprep.subr.bf16.mxu0 0
    %158 = vmatpush1.bf16.msra.mxu0 %v143
    %159 = vmatprep.subr.bf16.mxu0 0
    %160 = vmatpush1.bf16.msra.mxu0 %v144
    %161 = vmatprep.subr.bf16.mxu0 0
    %162 = vmatpush1.bf16.msra.mxu0 0
    %163 = vmatprep.subr.bf16.mxu0 0
    %164 = vmatpush1.bf16.msra.mxu0 0
    %165 = vmatprep.subr.bf16.mxu0 0
    %166 = vmatpush1.bf16.msra.mxu0 0
    %167 = vmatprep.subr.bf16.mxu0 0
    %168 = vmatpush1.bf16.msra.mxu0 0
    %169 = vmatprep.subr.bf16.mxu0 0
    %170 = vmatpush1.bf16.msra.mxu0 0
    %171 = vmatprep.subr.bf16.mxu0 0
    %172 = vmatpush1.bf16.msra.mxu0 0
    %173 = vmatprep.subr.bf16.mxu0 0
    %174 = vmatpush1.bf16.msra.mxu0 0
    %175 = vmatprep.subr.bf16.mxu0 0
    %176 = vmatpush1.bf16.msra.mxu0 0
    %177 = vmatprep.subr.bf16.mxu0 0
    %178 = vmatpush1.bf16.msra.mxu0 0
    %179 = vmatprep.subr.bf16.mxu0 0
    %180 = vmatpush1.bf16.msra.mxu0 0
    %181 = vmatprep.subr.bf16.mxu0 0
    %182 = vmatpush1.bf16.msra.mxu0 0
    %183 = vmatprep.subr.bf16.mxu0 0
    %184 = vmatpush1.bf16.msra.mxu0 0
    %185 = vmatprep.mubr.bf16.mxu0 0
    %186 = vmatmul.mubr.bf16.gmra.mrb[0].mxu0 %v151
    %v187 = vpop.f32.mrb[0].mxu0
    %v188 = vadd.f32 %v123, %v187
    %v189 = vpop.f32.mrb[0].mxu0
    %v190 = vpop.f32.mrb[0].mxu0
    %v191 = vpop.f32.mrb[0].mxu0
    %192 = vdwg.mxu0
    %v193 = vxor.u32 %v188, 2147483648
    %v194 = vmul.f32 %v193, 1.442695
    %v195 = vpow.pop %v194
    %v196 = vadd.f32 %v195, 1.0
    %v197 = vrcp.pop %v196
    %v198 = vmul.f32 1.0, %v197
    %v199 = vtanh.pop %v188
    %201 = vrot.lane.b32.xlu0 %v103, 32
    %v202 = vpop.permute.xlu0 %201
    %v204 = vmul.f32 %v198, %v202
    %206 = vrot.lane.b32.xlu0 %v199, 64
    %v207 = vpop.permute.xlu0 %206
    %v209 = vmul.f32 %v198, %v207
    %211 = vrot.lane.b32.xlu0 %v209, 32
    %v212 = vpop.permute.xlu0 %211
    %v214 = vadd.f32 %v204, %v212
    %v215 = vtanh.pop %v214
    %217 = vrot.lane.b32.xlu0 %v215, 64
    %v218 = vpop.permute.xlu0 %217
    %v220 = vmul.f32 %v198, %v218
    %222 = vrot.lane.b32.xlu0 %v220, 32
    %v223 = vpop.permute.xlu0 %222
    %225 = vst.msk [vmem:[#allocation2] sm:$0xff] %vm43, %v223
    %227 = vrot.lane.b32.xlu0 %v214, 96
    %v228 = vpop.permute.xlu0 %227
    %230 = vst.msk [vmem:[#allocation3] sm:$0xff] %vm43, %v228
    %v231 = vld [vmem:[%s61] sm:$0xff]
    %v232 = vld [vmem:[%s71] sm:$0xff]
    %234 = vrot.lane.b32.xlu0 %v231, 32
    %v235 = vpop.permute.xlu0 %234
    %v237 = vsel %vm43, %v223, %v235
    %v238 = vpack.c.bf16 %v237, %v237
    %s239 = scalar_lea.vmem %s2, 32
    %v240 = vld [vmem:[%s239] sm:$0xf]
    %v241 = vld [vmem:[%s239 + $0x4] sm:$0xf]
    %v242 = vld [vmem:[%s239 + $0x8] sm:$0xf]
    %v243 = vld [vmem:[%s239 + $0xc] sm:$0xf]
    %v244 = vld [vmem:[%s239 + $0x10] sm:$0xf]
    %v245 = vld [vmem:[%s239 + $0x14] sm:$0xf]
    %v246 = vld [vmem:[%s239 + $0x18] sm:$0xf]
    %v247 = vld [vmem:[%s239 + $0x1c] sm:$0xf]
    %s248 = scalar_lea.vmem %s3, 1
    %v249 = vld [vmem:[%s248] sm:$0x1]
    %v251 = vlaneseq
    %v252 = vshrl.u32 %v251, 7
    %v253 = vsub.s32 0, %v252
    %v254 = vrot.slane %v249, %v253
    %v264 = vunpack.c.l.b16 %v240
    %v265 = vunpack.c.l.b16 %v241
    %v266 = vunpack.c.l.b16 %v242
    %v267 = vunpack.c.l.b16 %v243
    %v268 = vunpack.c.l.b16 %v244
    %v269 = vunpack.c.l.b16 %v245
    %v270 = vunpack.c.l.b16 %v246
    %v271 = vunpack.c.l.b16 %v247
    %v272 = vpack.c.b16 %v265, %v264
    %v273 = vpack.c.b16 %v267, %v266
    %v274 = vpack.c.b16 %v269, %v268
    %v275 = vpack.c.b16 %v271, %v270
    %v281 = vsel %vm149, %v238, 0
    %283 = vmatprep.subr.bf16.mxu0 0
    %284 = vmatpush1.bf16.msra.mxu0 %v272
    %285 = vmatprep.subr.bf16.mxu0 0
    %286 = vmatpush1.bf16.msra.mxu0 %v273
    %287 = vmatprep.subr.bf16.mxu0 0
    %288 = vmatpush1.bf16.msra.mxu0 %v274
    %289 = vmatprep.subr.bf16.mxu0 0
    %290 = vmatpush1.bf16.msra.mxu0 %v275
    %291 = vmatprep.subr.bf16.mxu0 0
    %292 = vmatpush1.bf16.msra.mxu0 0
    %293 = vmatprep.subr.bf16.mxu0 0
    %294 = vmatpush1.bf16.msra.mxu0 0
    %295 = vmatprep.subr.bf16.mxu0 0
    %296 = vmatpush1.bf16.msra.mxu0 0
    %297 = vmatprep.subr.bf16.mxu0 0
    %298 = vmatpush1.bf16.msra.mxu0 0
    %299 = vmatprep.subr.bf16.mxu0 0
    %300 = vmatpush1.bf16.msra.mxu0 0
    %301 = vmatprep.subr.bf16.mxu0 0
    %302 = vmatpush1.bf16.msra.mxu0 0
    %303 = vmatprep.subr.bf16.mxu0 0
    %304 = vmatpush1.bf16.msra.mxu0 0
    %305 = vmatprep.subr.bf16.mxu0 0
    %306 = vmatpush1.bf16.msra.mxu0 0
    %307 = vmatprep.subr.bf16.mxu0 0
    %308 = vmatpush1.bf16.msra.mxu0 0
    %309 = vmatprep.subr.bf16.mxu0 0
    %310 = vmatpush1.bf16.msra.mxu0 0
    %311 = vmatprep.subr.bf16.mxu0 0
    %312 = vmatpush1.bf16.msra.mxu0 0
    %313 = vmatprep.subr.bf16.mxu0 0
    %314 = vmatpush1.bf16.msra.mxu0 0
    %315 = vmatprep.mubr.bf16.mxu0 0
    %316 = vmatmul.mubr.bf16.gmra.mrb[0].mxu0 %v281
    %v317 = vpop.f32.mrb[0].mxu0
    %v318 = vadd.f32 %v254, %v317
    %v319 = vpop.f32.mrb[0].mxu0
    %v320 = vpop.f32.mrb[0].mxu0
    %v321 = vpop.f32.mrb[0].mxu0
    %322 = vdwg.mxu0
    %v323 = vxor.u32 %v318, 2147483648
    %v324 = vmul.f32 %v323, 1.442695
    %v325 = vpow.pop %v324
    %v326 = vadd.f32 %v325, 1.0
    %v327 = vrcp.pop %v326
    %v328 = vmul.f32 1.0, %v327
    %v329 = vtanh.pop %v318
    %331 = vrot.lane.b32.xlu0 %v232, 32
    %v332 = vpop.permute.xlu0 %331
    %v334 = vmul.f32 %v328, %v332
    %336 = vrot.lane.b32.xlu0 %v329, 64
    %v337 = vpop.permute.xlu0 %336
    %v339 = vmul.f32 %v328, %v337
    %341 = vrot.lane.b32.xlu0 %v339, 32
    %v342 = vpop.permute.xlu0 %341
    %v344 = vadd.f32 %v334, %v342
    %v345 = vtanh.pop %v344
    %347 = vrot.lane.b32.xlu0 %v345, 64
    %v348 = vpop.permute.xlu0 %347
    %v350 = vmul.f32 %v328, %v348
    %352 = vrot.lane.b32.xlu0 %v350, 32
    %v353 = vpop.permute.xlu0 %352
    %355 = vst.msk [vmem:[%s61] sm:$0xff] %vm43, %v353
    %357 = vrot.lane.b32.xlu0 %v344, 96
    %v358 = vpop.permute.xlu0 %357
    %360 = vst.msk [vmem:[%s71] sm:$0xff] %vm43, %v358
    %v361 = vld [vmem:[%s81] sm:$0xff]
    %v362 = vld [vmem:[%s91] sm:$0xff]
    %364 = vrot.lane.b32.xlu0 %v361, 32
    %v365 = vpop.permute.xlu0 %364
    %v367 = vsel %vm43, %v353, %v365
    %v368 = vpack.c.bf16 %v367, %v367
    %s369 = scalar_lea.vmem %s2, 64
    %v370 = vld [vmem:[%s369] sm:$0xf]
    %v371 = vld [vmem:[%s369 + $0x4] sm:$0xf]
    %v372 = vld [vmem:[%s369 + $0x8] sm:$0xf]
    %v373 = vld [vmem:[%s369 + $0xc] sm:$0xf]
    %v374 = vld [vmem:[%s369 + $0x10] sm:$0xf]
    %v375 = vld [vmem:[%s369 + $0x14] sm:$0xf]
    %v376 = vld [vmem:[%s369 + $0x18] sm:$0xf]
    %v377 = vld [vmem:[%s369 + $0x1c] sm:$0xf]
    %s378 = scalar_lea.vmem %s3, 2
    %v379 = vld [vmem:[%s378] sm:$0x1]
    %v381 = vlaneseq
    %v382 = vshrl.u32 %v381, 7
    %v383 = vsub.s32 0, %v382
    %v384 = vrot.slane %v379, %v383
    %v394 = vunpack.c.l.b16 %v370
    %v395 = vunpack.c.l.b16 %v371
    %v396 = vunpack.c.l.b16 %v372
    %v397 = vunpack.c.l.b16 %v373
    %v398 = vunpack.c.l.b16 %v374
    %v399 = vunpack.c.l.b16 %v375
    %v400 = vunpack.c.l.b16 %v376
    %v401 = vunpack.c.l.b16 %v377
    %v402 = vpack.c.b16 %v395, %v394
    %v403 = vpack.c.b16 %v397, %v396
    %v404 = vpack.c.b16 %v399, %v398
    %v405 = vpack.c.b16 %v401, %v400
    %v411 = vsel %vm149, %v368, 0
    %413 = vmatprep.subr.bf16.mxu0 0
    %414 = vmatpush1.bf16.msra.mxu0 %v402
    %415 = vmatprep.subr.bf16.mxu0 0
    %416 = vmatpush1.bf16.msra.mxu0 %v403
    %417 = vmatprep.subr.bf16.mxu0 0
    %418 = vmatpush1.bf16.msra.mxu0 %v404
    %419 = vmatprep.subr.bf16.mxu0 0
    %420 = vmatpush1.bf16.msra.mxu0 %v405
    %421 = vmatprep.subr.bf16.mxu0 0
    %422 = vmatpush1.bf16.msra.mxu0 0
    %423 = vmatprep.subr.bf16.mxu0 0
    %424 = vmatpush1.bf16.msra.mxu0 0
    %425 = vmatprep.subr.bf16.mxu0 0
    %426 = vmatpush1.bf16.msra.mxu0 0
    %427 = vmatprep.subr.bf16.mxu0 0
    %428 = vmatpush1.bf16.msra.mxu0 0
    %429 = vmatprep.subr.bf16.mxu0 0
    %430 = vmatpush1.bf16.msra.mxu0 0
    %431 = vmatprep.subr.bf16.mxu0 0
    %432 = vmatpush1.bf16.msra.mxu0 0
    %433 = vmatprep.subr.bf16.mxu0 0
    %434 = vmatpush1.bf16.msra.mxu0 0
    %435 = vmatprep.subr.bf16.mxu0 0
    %436 = vmatpush1.bf16.msra.mxu0 0
    %437 = vmatprep.subr.bf16.mxu0 0
    %438 = vmatpush1.bf16.msra.mxu0 0
    %439 = vmatprep.subr.bf16.mxu0 0
    %440 = vmatpush1.bf16.msra.mxu0 0
    %441 = vmatprep.subr.bf16.mxu0 0
    %442 = vmatpush1.bf16.msra.mxu0 0
    %443 = vmatprep.subr.bf16.mxu0 0
    %444 = vmatpush1.bf16.msra.mxu0 0
    %445 = vmatprep.mubr.bf16.mxu0 0
    %446 = vmatmul.mubr.bf16.gmra.mrb[0].mxu0 %v411
    %v447 = vpop.f32.mrb[0].mxu0
    %v448 = vadd.f32 %v384, %v447
    %v449 = vpop.f32.mrb[0].mxu0
    %v450 = vpop.f32.mrb[0].mxu0
    %v451 = vpop.f32.mrb[0].mxu0
    %452 = vdwg.mxu0
    %v453 = vxor.u32 %v448, 2147483648
    %v454 = vmul.f32 %v453, 1.442695
    %v455 = vpow.pop %v454
    %v456 = vadd.f32 %v455, 1.0
    %v457 = vrcp.pop %v456
    %v458 = vmul.f32 1.0, %v457
    %v459 = vtanh.pop %v448
    %461 = vrot.lane.b32.xlu0 %v362, 32
    %v462 = vpop.permute.xlu0 %461
    %v464 = vmul.f32 %v458, %v462
    %466 = vrot.lane.b32.xlu0 %v459, 64
    %v467 = vpop.permute.xlu0 %466
    %v469 = vmul.f32 %v458, %v467
    %471 = vrot.lane.b32.xlu0 %v469, 32
    %v472 = vpop.permute.xlu0 %471
    %v474 = vadd.f32 %v464, %v472
    %v475 = vtanh.pop %v474
    %477 = vrot.lane.b32.xlu0 %v475, 64
    %v478 = vpop.permute.xlu0 %477
    %v480 = vmul.f32 %v458, %v478
    %482 = vrot.lane.b32.xlu0 %v480, 32
    %v483 = vpop.permute.xlu0 %482
    %485 = vst.msk [vmem:[%s81] sm:$0xff] %vm43, %v483
    %487 = vrot.lane.b32.xlu0 %v474, 96
    %v488 = vpop.permute.xlu0 %487
    %490 = vst.msk [vmem:[%s91] sm:$0xff] %vm43, %v488
  $region46: #{seq2seq_forward.1} parent=0 // loop_footer
    %s98 = sadd.s32 1, %s94
  $region47: #{seq2seq_forward.1} parent=0 // loop_footer_branch
    %93 = sbr.rel target = $region43
  $region48: #{seq2seq_forward.1} parent=0 // loop_exit
    _
  loop: start=0, step=1, limit=8
  $region49: #{seq2seq_forward.1} parent=0 // loop_pre_header
    _
  $region50: #{seq2seq_forward.1} parent=0 // loop_header
    %s492 = sphi 0, %s496
    %p493 = scmp.ge.s32.totalorder %s492, 8
  $region51: #{seq2seq_forward.1} parent=0 // loop_header_branch
    %495 = sbr.rel (%p493) target = $region55
  $region52: #{seq2seq_forward.1} parent=0 // loop_body
    %s497 = smul.u32 %s492, 8
    %s498 = scalar_lea.vmem %s1, %s497
    %v499 = vld [vmem:[%s498] sm:$0xff]
    %v500 = vld [vmem:[#allocation2] sm:$0xff]
    %v501 = vld [vmem:[#allocation3] sm:$0xff]
    %503 = vrot.lane.b32.xlu0 %v500, 32
    %v504 = vpop.permute.xlu0 %503
    %v506 = vsel %vm43, %v499, %v504
    %v507 = vpack.c.bf16 %v506, %v506
    %v508 = vld [vmem:[%s4] sm:$0xf]
    %v509 = vld [vmem:[%s4 + $0x4] sm:$0xf]
    %v510 = vld [vmem:[%s4 + $0x8] sm:$0xf]
    %v511 = vld [vmem:[%s4 + $0xc] sm:$0xf]
    %v512 = vld [vmem:[%s4 + $0x10] sm:$0xf]
    %v513 = vld [vmem:[%s4 + $0x14] sm:$0xf]
    %v514 = vld [vmem:[%s4 + $0x18] sm:$0xf]
    %v515 = vld [vmem:[%s4 + $0x1c] sm:$0xf]
    %v516 = vld [vmem:[%s5] sm:$0x1]
    %v518 = vlaneseq
    %v519 = vshrl.u32 %v518, 7
    %v520 = vsub.s32 0, %v519
    %v521 = vrot.slane %v516, %v520
    %v531 = vunpack.c.l.b16 %v508
    %v532 = vunpack.c.l.b16 %v509
    %v533 = vunpack.c.l.b16 %v510
    %v534 = vunpack.c.l.b16 %v511
    %v535 = vunpack.c.l.b16 %v512
    %v536 = vunpack.c.l.b16 %v513
    %v537 = vunpack.c.l.b16 %v514
    %v538 = vunpack.c.l.b16 %v515
    %v539 = vpack.c.b16 %v532, %v531
    %v540 = vpack.c.b16 %v534, %v533
    %v541 = vpack.c.b16 %v536, %v535
    %v542 = vpack.c.b16 %v538, %v537
    %vm547 = vcmask 523264
    %v549 = vsel %vm547, %v507, 0
    %551 = vmatprep.subr.bf16.mxu0 0
    %552 = vmatpush1.bf16.msra.mxu0 %v539
    %553 = vmatprep.subr.bf16.mxu0 0
    %554 = vmatpush1.bf16.msra.mxu0 %v540
    %555 = vmatprep.subr.bf16.mxu0 0
    %556 = vmatpush1.bf16.msra.mxu0 %v541
    %557 = vmatprep.subr.bf16.mxu0 0
    %558 = vmatpush1.bf16.msra.mxu0 %v542
    %559 = vmatprep.subr.bf16.mxu0 0
    %560 = vmatpush1.bf16.msra.mxu0 0
    %561 = vmatprep.subr.bf16.mxu0 0
    %562 = vmatpush1.bf16.msra.mxu0 0
    %563 = vmatprep.subr.bf16.mxu0 0
    %564 = vmatpush1.bf16.msra.mxu0 0
    %565 = vmatprep.subr.bf16.mxu0 0
    %566 = vmatpush1.bf16.msra.mxu0 0
    %567 = vmatprep.subr.bf16.mxu0 0
    %568 = vmatpush1.bf16.msra.mxu0 0
    %569 = vmatprep.subr.bf16.mxu0 0
    %570 = vmatpush1.bf16.msra.mxu0 0
    %571 = vmatprep.subr.bf16.mxu0 0
    %572 = vmatpush1.bf16.msra.mxu0 0
    %573 = vmatprep.subr.bf16.mxu0 0
    %574 = vmatpush1.bf16.msra.mxu0 0
    %575 = vmatprep.subr.bf16.mxu0 0
    %576 = vmatpush1.bf16.msra.mxu0 0
    %577 = vmatprep.subr.bf16.mxu0 0
    %578 = vmatpush1.bf16.msra.mxu0 0
    %579 = vmatprep.subr.bf16.mxu0 0
    %580 = vmatpush1.bf16.msra.mxu0 0
    %581 = vmatprep.subr.bf16.mxu0 0
    %582 = vmatpush1.bf16.msra.mxu0 0
    %583 = vmatprep.mubr.bf16.mxu0 0
    %584 = vmatmul.mubr.bf16.gmra.mrb[0].mxu0 %v549
    %v585 = vpop.f32.mrb[0].mxu0
    %v586 = vadd.f32 %v521, %v585
    %v587 = vpop.f32.mrb[0].mxu0
    %v588 = vpop.f32.mrb[0].mxu0
    %v589 = vpop.f32.mrb[0].mxu0
    %590 = vdwg.mxu0
    %v591 = vxor.u32 %v586, 2147483648
    %v592 = vmul.f32 %v591, 1.442695
    %v593 = vpow.pop %v592
    %v594 = vadd.f32 %v593, 1.0
    %v595 = vrcp.pop %v594
    %v596 = vmul.f32 1.0, %v595
    %v597 = vtanh.pop %v586
    %599 = vrot.lane.b32.xlu0 %v501, 32
    %v600 = vpop.permute.xlu0 %599
    %v602 = vmul.f32 %v596, %v600
    %604 = vrot.lane.b32.xlu0 %v597, 64
    %v605 = vpop.permute.xlu0 %604
    %v607 = vmul.f32 %v596, %v605
    %609 = vrot.lane.b32.xlu0 %v607, 32
    %v610 = vpop.permute.xlu0 %609
    %v612 = vadd.f32 %v602, %v610
    %v613 = vtanh.pop %v612
    %615 = vrot.lane.b32.xlu0 %v613, 64
    %v616 = vpop.permute.xlu0 %615
    %v618 = vmul.f32 %v596, %v616
    %620 = vrot.lane.b32.xlu0 %v618, 32
    %v621 = vpop.permute.xlu0 %620
    %623 = vst.msk [vmem:[#allocation2] sm:$0xff] %vm43, %v621
    %625 = vrot.lane.b32.xlu0 %v612, 96
    %v626 = vpop.permute.xlu0 %625
    %628 = vst.msk [vmem:[#allocation3] sm:$0xff] %vm43, %v626
    %v629 = vld [vmem:[%s61] sm:$0xff]
    %v630 = vld [vmem:[%s71] sm:$0xff]
    %632 = vrot.lane.b32.xlu0 %v629, 32
    %v633 = vpop.permute.xlu0 %632
    %v635 = vsel %vm43, %v621, %v633
    %v636 = vpack.c.bf16 %v635, %v635
    %s637 = scalar_lea.vmem %s4, 32
    %v638 = vld [vmem:[%s637] sm:$0xf]
    %v639 = vld [vmem:[%s637 + $0x4] sm:$0xf]
    %v640 = vld [vmem:[%s637 + $0x8] sm:$0xf]
    %v641 = vld [vmem:[%s637 + $0xc] sm:$0xf]
    %v642 = vld [vmem:[%s637 + $0x10] sm:$0xf]
    %v643 = vld [vmem:[%s637 + $0x14] sm:$0xf]
    %v644 = vld [vmem:[%s637 + $0x18] sm:$0xf]
    %v645 = vld [vmem:[%s637 + $0x1c] sm:$0xf]
    %s646 = scalar_lea.vmem %s5, 1
    %v647 = vld [vmem:[%s646] sm:$0x1]
    %v649 = vlaneseq
    %v650 = vshrl.u32 %v649, 7
    %v651 = vsub.s32 0, %v650
    %v652 = vrot.slane %v647, %v651
    %v662 = vunpack.c.l.b16 %v638
    %v663 = vunpack.c.l.b16 %v639
    %v664 = vunpack.c.l.b16 %v640
    %v665 = vunpack.c.l.b16 %v641
    %v666 = vunpack.c.l.b16 %v642
    %v667 = vunpack.c.l.b16 %v643
    %v668 = vunpack.c.l.b16 %v644
    %v669 = vunpack.c.l.b16 %v645
    %v670 = vpack.c.b16 %v663, %v662
    %v671 = vpack.c.b16 %v665, %v664
    %v672 = vpack.c.b16 %v667, %v666
    %v673 = vpack.c.b16 %v669, %v668
    %v679 = vsel %vm547, %v636, 0
    %681 = vmatprep.subr.bf16.mxu0 0
    %682 = vmatpush1.bf16.msra.mxu0 %v670
    %683 = vmatprep.subr.bf16.mxu0 0
    %684 = vmatpush1.bf16.msra.mxu0 %v671
    %685 = vmatprep.subr.bf16.mxu0 0
    %686 = vmatpush1.bf16.msra.mxu0 %v672
    %687 = vmatprep.subr.bf16.mxu0 0
    %688 = vmatpush1.bf16.msra.mxu0 %v673
    %689 = vmatprep.subr.bf16.mxu0 0
    %690 = vmatpush1.bf16.msra.mxu0 0
    %691 = vmatprep.subr.bf16.mxu0 0
    %692 = vmatpush1.bf16.msra.mxu0 0
    %693 = vmatprep.subr.bf16.mxu0 0
    %694 = vmatpush1.bf16.msra.mxu0 0
    %695 = vmatprep.subr.bf16.mxu0 0
    %696 = vmatpush1.bf16.msra.mxu0 0
    %697 = vmatprep.subr.bf16.mxu0 0
    %698 = vmatpush1.bf16.msra.mxu0 0
    %699 = vmatprep.subr.bf16.mxu0 0
    %700 = vmatpush1.bf16.msra.mxu0 0
    %701 = vmatprep.subr.bf16.mxu0 0
    %702 = vmatpush1.bf16.msra.mxu0 0
    %703 = vmatprep.subr.bf16.mxu0 0
    %704 = vmatpush1.bf16.msra.mxu0 0
    %705 = vmatprep.subr.bf16.mxu0 0
    %706 = vmatpush1.bf16.msra.mxu0 0
    %707 = vmatprep.subr.bf16.mxu0 0
    %708 = vmatpush1.bf16.msra.mxu0 0
    %709 = vmatprep.subr.bf16.mxu0 0
    %710 = vmatpush1.bf16.msra.mxu0 0
    %711 = vmatprep.subr.bf16.mxu0 0
    %712 = vmatpush1.bf16.msra.mxu0 0
    %713 = vmatprep.mubr.bf16.mxu0 0
    %714 = vmatmul.mubr.bf16.gmra.mrb[0].mxu0 %v679
    %v715 = vpop.f32.mrb[0].mxu0
    %v716 = vadd.f32 %v652, %v715
    %v717 = vpop.f32.mrb[0].mxu0
    %v718 = vpop.f32.mrb[0].mxu0
    %v719 = vpop.f32.mrb[0].mxu0
    %720 = vdwg.mxu0
    %v721 = vxor.u32 %v716, 2147483648
    %v722 = vmul.f32 %v721, 1.442695
    %v723 = vpow.pop %v722
    %v724 = vadd.f32 %v723, 1.0
    %v725 = vrcp.pop %v724
    %v726 = vmul.f32 1.0, %v725
    %v727 = vtanh.pop %v716
    %729 = vrot.lane.b32.xlu0 %v630, 32
    %v730 = vpop.permute.xlu0 %729
    %v732 = vmul.f32 %v726, %v730
    %734 = vrot.lane.b32.xlu0 %v727, 64
    %v735 = vpop.permute.xlu0 %734
    %v737 = vmul.f32 %v726, %v735
    %739 = vrot.lane.b32.xlu0 %v737, 32
    %v740 = vpop.permute.xlu0 %739
    %v742 = vadd.f32 %v732, %v740
    %v743 = vtanh.pop %v742
    %745 = vrot.lane.b32.xlu0 %v743, 64
    %v746 = vpop.permute.xlu0 %745
    %v748 = vmul.f32 %v726, %v746
    %750 = vrot.lane.b32.xlu0 %v748, 32
    %v751 = vpop.permute.xlu0 %750
    %753 = vst.msk [vmem:[%s61] sm:$0xff] %vm43, %v751
    %755 = vrot.lane.b32.xlu0 %v742, 96
    %v756 = vpop.permute.xlu0 %755
    %758 = vst.msk [vmem:[%s71] sm:$0xff] %vm43, %v756
    %v759 = vld [vmem:[%s81] sm:$0xff]
    %v760 = vld [vmem:[%s91] sm:$0xff]
    %762 = vrot.lane.b32.xlu0 %v759, 32
    %v763 = vpop.permute.xlu0 %762
    %v765 = vsel %vm43, %v751, %v763
    %v766 = vpack.c.bf16 %v765, %v765
    %s767 = scalar_lea.vmem %s4, 64
    %v768 = vld [vmem:[%s767] sm:$0xf]
    %v769 = vld [vmem:[%s767 + $0x4] sm:$0xf]
    %v770 = vld [vmem:[%s767 + $0x8] sm:$0xf]
    %v771 = vld [vmem:[%s767 + $0xc] sm:$0xf]
    %v772 = vld [vmem:[%s767 + $0x10] sm:$0xf]
    %v773 = vld [vmem:[%s767 + $0x14] sm:$0xf]
    %v774 = vld [vmem:[%s767 + $0x18] sm:$0xf]
    %v775 = vld [vmem:[%s767 + $0x1c] sm:$0xf]
    %s776 = scalar_lea.vmem %s5, 2
    %v777 = vld [vmem:[%s776] sm:$0x1]
    %v779 = vlaneseq
    %v780 = vshrl.u32 %v779, 7
    %v781 = vsub.s32 0, %v780
    %v782 = vrot.slane %v777, %v781
    %v792 = vunpack.c.l.b16 %v768
    %v793 = vunpack.c.l.b16 %v769
    %v794 = vunpack.c.l.b16 %v770
    %v795 = vunpack.c.l.b16 %v771
    %v796 = vunpack.c.l.b16 %v772
    %v797 = vunpack.c.l.b16 %v773
    %v798 = vunpack.c.l.b16 %v774
    %v799 = vunpack.c.l.b16 %v775
    %v800 = vpack.c.b16 %v793, %v792
    %v801 = vpack.c.b16 %v795, %v794
    %v802 = vpack.c.b16 %v797, %v796
    %v803 = vpack.c.b16 %v799, %v798
    %v809 = vsel %vm547, %v766, 0
    %811 = vmatprep.subr.bf16.mxu0 0
    %812 = vmatpush1.bf16.msra.mxu0 %v800
    %813 = vmatprep.subr.bf16.mxu0 0
    %814 = vmatpush1.bf16.msra.mxu0 %v801
    %815 = vmatprep.subr.bf16.mxu0 0
    %816 = vmatpush1.bf16.msra.mxu0 %v802
    %817 = vmatprep.subr.bf16.mxu0 0
    %818 = vmatpush1.bf16.msra.mxu0 %v803
    %819 = vmatprep.subr.bf16.mxu0 0
    %820 = vmatpush1.bf16.msra.mxu0 0
    %821 = vmatprep.subr.bf16.mxu0 0
    %822 = vmatpush1.bf16.msra.mxu0 0
    %823 = vmatprep.subr.bf16.mxu0 0
    %824 = vmatpush1.bf16.msra.mxu0 0
    %825 = vmatprep.subr.bf16.mxu0 0
    %826 = vmatpush1.bf16.msra.mxu0 0
    %827 = vmatprep.subr.bf16.mxu0 0
    %828 = vmatpush1.bf16.msra.mxu0 0
    %829 = vmatprep.subr.bf16.mxu0 0
    %830 = vmatpush1.bf16.msra.mxu0 0
    %831 = vmatprep.subr.bf16.mxu0 0
    %832 = vmatpush1.bf16.msra.mxu0 0
    %833 = vmatprep.subr.bf16.mxu0 0
    %834 = vmatpush1.bf16.msra.mxu0 0
    %835 = vmatprep.subr.bf16.mxu0 0
    %836 = vmatpush1.bf16.msra.mxu0 0
    %837 = vmatprep.subr.bf16.mxu0 0
    %838 = vmatpush1.bf16.msra.mxu0 0
    %839 = vmatprep.subr.bf16.mxu0 0
    %840 = vmatpush1.bf16.msra.mxu0 0
    %841 = vmatprep.subr.bf16.mxu0 0
    %842 = vmatpush1.bf16.msra.mxu0 0
    %843 = vmatprep.mubr.bf16.mxu0 0
    %844 = vmatmul.mubr.bf16.gmra.mrb[0].mxu0 %v809
    %v845 = vpop.f32.mrb[0].mxu0
    %v846 = vadd.f32 %v782, %v845
    %v847 = vpop.f32.mrb[0].mxu0
    %v848 = vpop.f32.mrb[0].mxu0
    %v849 = vpop.f32.mrb[0].mxu0
    %850 = vdwg.mxu0
    %v851 = vxor.u32 %v846, 2147483648
    %v852 = vmul.f32 %v851, 1.442695
    %v853 = vpow.pop %v852
    %v854 = vadd.f32 %v853, 1.0
    %v855 = vrcp.pop %v854
    %v856 = vmul.f32 1.0, %v855
    %v857 = vtanh.pop %v846
    %859 = vrot.lane.b32.xlu0 %v760, 32
    %v860 = vpop.permute.xlu0 %859
    %v862 = vmul.f32 %v856, %v860
    %864 = vrot.lane.b32.xlu0 %v857, 64
    %v865 = vpop.permute.xlu0 %864
    %v867 = vmul.f32 %v856, %v865
    %869 = vrot.lane.b32.xlu0 %v867, 32
    %v870 = vpop.permute.xlu0 %869
    %v872 = vadd.f32 %v862, %v870
    %v873 = vtanh.pop %v872
    %875 = vrot.lane.b32.xlu0 %v873, 64
    %v876 = vpop.permute.xlu0 %875
    %v878 = vmul.f32 %v856, %v876
    %880 = vrot.lane.b32.xlu0 %v878, 32
    %v881 = vpop.permute.xlu0 %880
    %883 = vst.msk [vmem:[%s81] sm:$0xff] %vm43, %v881
    %885 = vrot.lane.b32.xlu0 %v872, 96
    %v886 = vpop.permute.xlu0 %885
    %888 = vst.msk [vmem:[%s91] sm:$0xff] %vm43, %v886
    %v889 = vpack.c.bf16 %v878, %v878
    %v890 = vld [vmem:[%s8] sm:$0xf]
    %v891 = vld [vmem:[%s8 + $0x4] sm:$0xf]
    %v892 = vld [vmem:[%s8 + $0x8] sm:$0xf]
    %v893 = vld [vmem:[%s8 + $0xc] sm:$0xf]
    %v894 = vld [vmem:[%s9] sm:$0x1]
    %v896 = vlaneseq
    %v897 = vshrl.u32 %v896, 7
    %v898 = vsub.s32 0, %v897
    %v899 = vrot.slane %v894, %v898
    %902 = vrot.lane.b32.xlu0 %v889, 32
    %v903 = vpop.permute.xlu0 %902
    %v908 = vunpack.c.l.b16 %v890
    %v909 = vunpack.c.l.b16 %v891
    %v910 = vunpack.c.l.b16 %v892
    %v911 = vunpack.c.l.b16 %v893
    %v912 = vpack.c.b16 %v909, %v908
    %v913 = vpack.c.b16 %v911, %v910
    %v917 = vsel %vm43, %v903, 0
    %919 = vmatprep.subr.bf16.mxu0 0
    %920 = vmatpush1.bf16.msra.mxu0 %v912
    %921 = vmatprep.subr.bf16.mxu0 0
    %922 = vmatpush1.bf16.msra.mxu0 %v913
    %923 = vmatprep.subr.bf16.mxu0 0
    %924 = vmatpush1.bf16.msra.mxu0 0
    %925 = vmatprep.subr.bf16.mxu0 0
    %926 = vmatpush1.bf16.msra.mxu0 0
    %927 = vmatprep.subr.bf16.mxu0 0
    %928 = vmatpush1.bf16.msra.mxu0 0
    %929 = vmatprep.subr.bf16.mxu0 0
    %930 = vmatpush1.bf16.msra.mxu0 0
    %931 = vmatprep.subr.bf16.mxu0 0
    %932 = vmatpush1.bf16.msra.mxu0 0
    %933 = vmatprep.subr.bf16.mxu0 0
    %934 = vmatpush1.bf16.msra.mxu0 0
    %935 = vmatprep.subr.bf16.mxu0 0
    %936 = vmatpush1.bf16.msra.mxu0 0
    %937 = vmatprep.subr.bf16.mxu0 0
    %938 = vmatpush1.bf16.msra.mxu0 0
    %939 = vmatprep.subr.bf16.mxu0 0
    %940 = vmatpush1.bf16.msra.mxu0 0
    %941 = vmatprep.subr.bf16.mxu0 0
    %942 = vmatpush1.bf16.msra.mxu0 0
    %943 = vmatprep.subr.bf16.mxu0 0
    %944 = vmatpush1.bf16.msra.mxu0 0
    %945 = vmatprep.subr.bf16.mxu0 0
    %946 = vmatpush1.bf16.msra.mxu0 0
    %947 = vmatprep.subr.bf16.mxu0 0
    %948 = vmatpush1.bf16.msra.mxu0 0
    %949 = vmatprep.subr.bf16.mxu0 0
    %950 = vmatpush1.bf16.msra.mxu0 0
    %951 = vmatprep.mubr.bf16.mxu0 0
    %952 = vmatmul.mubr.bf16.gmra.mrb[0].mxu0 %v917
    %v953 = vpop.f32.mrb[0].mxu0
    %v954 = vadd.f32 %v899, %v953
    %v955 = vpop.f32.mrb[0].mxu0
    %v956 = vpop.f32.mrb[0].mxu0
    %v957 = vpop.f32.mrb[0].mxu0
    %958 = vdwg.mxu0
    %s959 = scalar_lea.vmem %s10, %s497
    %960 = vst [vmem:[%s959] sm:$0xff] %v954
  $region53: #{seq2seq_forward.1} parent=0 // loop_footer
    %s496 = sadd.s32 1, %s492
  $region54: #{seq2seq_forward.1} parent=0 // loop_footer_branch
    %491 = sbr.rel target = $region50
  $region55: #{seq2seq_forward.1} parent=0 // loop_exit
    _
  // Predicated region
  $region56: #{seq2seq_forward.1} parent=0 // pred_check
    _
  $region57: #{seq2seq_forward.1} parent=0 // pred_check_branch
    %962 = sbr.rel (0) target = $region59
  $region58: #{seq2seq_forward.1} parent=0 // pred_region
    _
  $region59: #{seq2seq_forward.1} parent=0 // pred_fallthru
    _
  // Predicated region
  $region60: #{seq2seq_forward.1} parent=0 // pred_check
    _
  $region61: #{seq2seq_forward.1} parent=0 // pred_check_branch
    %964 = sbr.rel (0) target = $region63
  $region62: #{seq2seq_forward.1} parent=0 // pred_region
    _
  $region63: #{seq2seq_forward.1} parent=0 // pred_fallthru
    _

</llo_original>
